<compile_context>
chip_gen: v7x
topology: tpu7x:2x2x1
jax: 0.10.0
libtpu: 0.0.40
codegen_flags: <defaults>
</compile_context>

<pallas_src>
import functools
import math

import jax
import jax.numpy as jnp
from jax.experimental import pallas as pl
from jax.experimental.pallas import tpu as pltpu


def _sigmoid(v):
    return 1.0 / (1.0 + jnp.exp(-v))


def _swish(v):
    return v * _sigmoid(v)


def _bdot(a, w):
    # bf16 operands on the MXU, f32 accumulation (w refs are already bf16).
    return jnp.dot(a.astype(jnp.bfloat16), w, preferred_element_type=jnp.float32)


def _rt_head_kernel(x_ref, w0x4_ref, wstk_ref, bstk_ref, wd_ref, wsig_ref,
                    wrgb_ref, hb_ref, o_ref, h_scr, xskip_scr,
                    *, skip_stage, width, half, scale_t, eps):
    """One streamed [W,W] xyz layer per (row_block, stage) grid step.

    Stage s computes xyz_encoding_{s+2} (s = 0..D-2) and stage D-1 computes
    xyz_encoding_final + all heads + quaternion -> rotation | translation.
    Layer 0 (xyz_encoding_1) and the skip-layer x-term run in the s==0 prologue.
    """
    s = pl.program_id(1)                 # stage axis (innermost, sequential)
    n_stage = pl.num_programs(1)

    # ---- prologue (stage 0 only): layer 0 + skip-layer x-contribution --------
    @pl.when(s == 0)
    def _():
        xw = _bdot(x_ref[...], w0x4_ref[...])              # [BN, 2W] = [x@W0 | x@Wskip_x]
        h_scr[...] = _swish(xw[:, :width] + hb_ref[0:1, :])
        xskip_scr[...] = xw[:, width:]

    # ---- one streamed [W, W] layer (weights/biases double-buffered by Pallas) -
    h = h_scr[...]                                         # previous layer output
    skip_f = jnp.where(s == skip_stage, 1.0, 0.0)          # scalar mask, no branch
    z = _bdot(h, wstk_ref[0]) + bstk_ref[0] + skip_f * xskip_scr[...]

    @pl.when(s != n_stage - 1)
    def _():
        h_scr[...] = _swish(z)

    # ---- epilogue (last stage): heads + quaternion -> [R(9) | t(3)] ----------
    @pl.when(s == n_stage - 1)
    def _():
        hf = z                                                           # xyz_encoding_final (no act.)
        sigma = _bdot(h, wsig_ref[...]) + hb_ref[2:3, 0:1]               # [BN, 1]
        de = _swish(_bdot(hf, wd_ref[...]) + hb_ref[1:2, 0:half])        # [BN, W//2]
        rgb = _sigmoid(_bdot(de, wrgb_ref[...]) + hb_ref[3:4, 0:8])      # [BN, 8] (cols 6,7 pad)

        tmat = rgb[:, 0:3] * scale_t                                     # translation
        qr, qi, qj, qk = rgb[:, 3:4], rgb[:, 4:5], rgb[:, 5:6], sigma

        # F.normalize(p=2, dim=-1, eps=1e-12)
        norm = jnp.sqrt(qr * qr + qi * qi + qj * qj + qk * qk)
        inv = pl.reciprocal(jnp.maximum(norm, eps), approx=True)
        r = qr * inv
        i = qi * inv
        j = qj * inv
        k = qk * inv

        # pytorch3d quaternion_to_matrix (real-part-first convention)
        two_s = 2.0 / (r * r + i * i + j * j + k * k)

        o_ref[...] = jnp.concatenate([
            1.0 - two_s * (j * j + k * k),
            two_s * (i * j - k * r),
            two_s * (i * k + j * r),
            two_s * (i * j + k * r),
            1.0 - two_s * (i * i + k * k),
            two_s * (j * k - i * r),
            two_s * (i * k - j * r),
            two_s * (j * k + i * r),
            1.0 - two_s * (i * i + j * j),
            tmat,
        ], axis=-1)                                                      # one [BN,12] store


def banmo_rt_head(x, xyz_params, w_final, b_final, w_dir, b_dir,
                  w_sigma, b_sigma, w_rgb, b_rgb,
                  *, skips=(4,), scale_t=0.1, row_block=None):
    """x: [N, Cin] f32.  xyz_params: list of (w [fan_in, W], b [W]) per layer,
    `y = x @ W + b` convention.  Returns [N, 1, 12] = cat([rotation(9), t(3)])."""
    N, Cin = x.shape
    D = len(xyz_params)
    W = w_final.shape[0]
    half = w_dir.shape[1]
    out_ch = w_rgb.shape[1]
    assert len(skips) == 1 and 1 <= skips[0] < D, "only a single skip layer supported"
    assert 6 <= out_ch <= 8 and half <= W
    skip_layer = int(skips[0])
    skip_stage = skip_layer - 1            # stage s computes xyz layer s+1

    f32, bf16 = jnp.float32, jnp.bfloat16

    # --- prologue weight: [x @ W0 | x @ Wskip_x] fused into one [Cin, 2W] matmul
    w0 = jnp.asarray(xyz_params[0][0], f32)
    wskip_x = jnp.asarray(xyz_params[skip_layer][0], f32)[:Cin, :]
    w0x4 = jnp.concatenate([w0, wskip_x], axis=1).astype(bf16)           # [Cin, 2W]

    # --- streamed [W, W] stack: layers 1..D-1 (skip layer keeps only its
    #     h-columns; its x-columns were folded into w0x4) + xyz_encoding_final
    stk, bst = [], []
    for layer in range(1, D):
        w, b = xyz_params[layer]
        w = jnp.asarray(w, f32)
        if layer == skip_layer:
            w = w[Cin:, :]
        stk.append(w)
        bst.append(jnp.asarray(b, f32).reshape(1, W))
    stk.append(jnp.asarray(w_final, f32))
    bst.append(jnp.asarray(b_final, f32).reshape(1, W))
    wstk = jnp.stack(stk, axis=0).astype(bf16)                           # [D, W, W] bf16
    bstk = jnp.stack(bst, axis=0)                                        # [D, 1, W] f32

    # --- small resident head weights (bf16) + packed head biases (single DMA)
    wd = jnp.asarray(w_dir, f32).astype(bf16)                            # [W, W//2]
    wsig = jnp.asarray(w_sigma, f32).astype(bf16)                        # [W, 1]
    wrgb8 = jnp.zeros((half, 8), f32).at[:, :out_ch].set(
        jnp.asarray(w_rgb, f32)).astype(bf16)                            # [W//2, 8]

    hb = jnp.zeros((8, W), f32)
    hb = hb.at[0, :].set(jnp.asarray(xyz_params[0][1], f32))             # b0
    hb = hb.at[1, :half].set(jnp.asarray(b_dir, f32))                    # b_dir
    hb = hb.at[2, 0].set(jnp.asarray(b_sigma, f32).reshape(-1)[0])       # b_sigma
    hb = hb.at[3, :out_ch].set(jnp.asarray(b_rgb, f32))                  # b_rgb (padded)

    if row_block is None:
        row_block = N                     # tiny batch: one row block
    assert N % row_block == 0
    n_stage = D                           # layers 1..D-1 + xyz_encoding_final
    grid = (N // row_block, n_stage)

    args = [jnp.asarray(x, f32), w0x4, wstk, bstk, wd, wsig, wrgb8, hb]
    in_specs = [
        pl.BlockSpec((row_block, Cin), lambda r, s: (r, 0)),             # x
        pl.BlockSpec(w0x4.shape, lambda r, s: (0, 0)),                   # resident
        pl.BlockSpec((1, W, W), lambda r, s: (s, 0, 0)),                 # streamed weights
        pl.BlockSpec((1, 1, W), lambda r, s: (s, 0, 0)),                 # streamed biases
        pl.BlockSpec(wd.shape, lambda r, s: (0, 0)),                     # resident
        pl.BlockSpec(wsig.shape, lambda r, s: (0, 0)),                   # resident
        pl.BlockSpec(wrgb8.shape, lambda r, s: (0, 0)),                  # resident
        pl.BlockSpec(hb.shape, lambda r, s: (0, 0)),                     # resident
    ]
    out_specs = pl.BlockSpec((row_block, 12), lambda r, s: (r, 0))       # written at last stage

    kernel = functools.partial(
        _rt_head_kernel, skip_stage=skip_stage, width=W, half=half,
        scale_t=scale_t, eps=1e-12)

    flops = 2 * N * (Cin * 2 * W + n_stage * W * W + W + W * half + half * 8)
    transcendentals = N * (D * W + half + 16)
    bytes_accessed = sum(int(a.size) * a.dtype.itemsize for a in args) + N * 12 * 4

    out = pl.pallas_call(
        kernel,
        out_shape=jax.ShapeDtypeStruct((N, 12), jnp.float32),
        grid=grid,
        in_specs=in_specs,
        out_specs=out_specs,
        scratch_shapes=[pltpu.VMEM((row_block, W), jnp.float32),   # running activation h
                        pltpu.VMEM((row_block, W), jnp.float32)],  # x @ Wskip_x (skip term)
        compiler_params=pltpu.CompilerParams(
            dimension_semantics=("parallel", "arbitrary")),
        cost_estimate=pl.CostEstimate(flops=flops,
                                      transcendentals=transcendentals,
                                      bytes_accessed=bytes_accessed),
    )(*args)
    return out.reshape(N, 1, 12)


def banmo_rt_head_ref(x, xyz_params, w_final, b_final, w_dir, b_dir,
                      w_sigma, b_sigma, w_rgb, b_rgb,
                      *, in_channels_xyz, skips=(4,), scale_t=0.1, num_output=7):
    """Pure-JAX reference mirroring the PyTorch forward (use_quat=True, raw_feat=False)."""
    hp = jax.lax.Precision.HIGHEST

    def dot(a, b):
        return jnp.dot(a, b, precision=hp)

    input_xyz = x[:, :in_channels_xyz]
    input_dir = x[:, in_channels_xyz:in_channels_xyz]          # zero-width split
    h = input_xyz
    for layer, (w, b) in enumerate(xyz_params):
        if layer in skips:
            h = jnp.concatenate([input_xyz, h], axis=-1)
        h = _swish(dot(h, w) + b)
    sigma = dot(h, w_sigma) + b_sigma
    hf = dot(h, w_final) + b_final
    de = _swish(dot(jnp.concatenate([hf, input_dir], axis=-1), w_dir) + b_dir)
    rgb = _sigmoid(dot(de, w_rgb) + b_rgb)                      # raw_feat=False
    xo = jnp.concatenate([rgb, sigma], axis=-1)                 # [bs, 7]

    bs = x.shape[0]
    rts = xo.reshape(-1, num_output)
    tmat = rts[:, 0:3] * scale_t
    q = rts[:, 3:7]
    q = q / jnp.maximum(jnp.linalg.norm(q, axis=-1, keepdims=True), 1e-12)
    r, i, j, k = q[:, 0], q[:, 1], q[:, 2], q[:, 3]
    two_s = 2.0 / jnp.sum(q * q, axis=-1)
    rmat = jnp.stack([
        1 - two_s * (j * j + k * k),
        two_s * (i * j - k * r),
        two_s * (i * k + j * r),
        two_s * (i * j + k * r),
        1 - two_s * (i * i + k * k),
        two_s * (j * k - i * r),
        two_s * (i * k - j * r),
        two_s * (j * k + i * r),
        1 - two_s * (i * i + j * j),
    ], axis=-1)                                                 # [bs, 9]
    return jnp.concatenate([rmat, tmat], axis=-1).reshape(bs, 1, -1)


if __name__ == "__main__":
    D, W, Cin = 8, 256, 63
    skips = (4,)
    out_channels = 6          # + sigma -> 7 channels/row = num_output (use_quat=True)
    N = 16                    # batch of pose-code rows

    key = jax.random.PRNGKey(0)
    keys = jax.random.split(key, 2 * D + 10)
    _ki = iter(range(len(keys)))

    def rnd(shape, scale):
        return scale * jax.random.normal(keys[next(_ki)], shape, dtype=jnp.float32)

    x = rnd((N, Cin), 1.0)

    xyz_params = []
    for layer in range(D):
        fan_in = Cin if layer == 0 else (W + Cin if layer in skips else W)
        xyz_params.append((rnd((fan_in, W), 1.0 / math.sqrt(fan_in)),
                           rnd((W,), 0.05)))
    w_final = rnd((W, W), 1.0 / math.sqrt(W))
    b_final = rnd((W,), 0.05)
    w_dir = rnd((W, W // 2), 1.0 / math.sqrt(W))      # in_channels_dir == 0
    b_dir = rnd((W // 2,), 0.05)
    w_sigma = rnd((W, 1), 1.0 / math.sqrt(W))
    b_sigma = rnd((1,), 0.05)
    w_rgb = rnd((W // 2, out_channels), 1.0 / math.sqrt(W // 2))
    b_rgb = rnd((out_channels,), 0.05)

    out = banmo_rt_head(x, xyz_params, w_final, b_final, w_dir, b_dir,
                        w_sigma, b_sigma, w_rgb, b_rgb, skips=skips)
    out = jax.block_until_ready(out)

    ref = banmo_rt_head_ref(x, xyz_params, w_final, b_final, w_dir, b_dir,
                            w_sigma, b_sigma, w_rgb, b_rgb,
                            in_channels_xyz=Cin, skips=skips)

    assert out.shape == (N, 1, 12), out.shape
    # tolerance covers bf16 single-pass MXU operand rounding (kernel) vs the
    # Precision.HIGHEST f32 reference across the 10 fused linear layers
    assert jnp.allclose(out, ref, atol=2e-2, rtol=2e-2), (
        "max abs diff = %g" % float(jnp.max(jnp.abs(out - ref))))

    print("KERNEL_OK")
</pallas_src>

<mosaic_0001>
module attributes {stable_mosaic.version = 11 : i64} {
  func.func @_rt_head_kernel(%arg0: i32, %arg1: i32, %arg2: memref<16x63xf32, #tpu.memory_space<vmem>>, %arg3: memref<63x512xbf16, #tpu.memory_space<vmem>>, %arg4: memref<1x256x256xbf16, #tpu.memory_space<vmem>>, %arg5: memref<1x1x256xf32, #tpu.memory_space<vmem>>, %arg6: memref<256x128xbf16, #tpu.memory_space<vmem>>, %arg7: memref<256x1xbf16, #tpu.memory_space<vmem>>, %arg8: memref<128x8xbf16, #tpu.memory_space<vmem>>, %arg9: memref<8x256xf32, #tpu.memory_space<vmem>>, %arg10: memref<16x12xf32, #tpu.memory_space<vmem>>, %arg11: memref<16x256xf32, #tpu.memory_space<vmem>>, %arg12: memref<16x256xf32, #tpu.memory_space<vmem>>) attributes {dimension_semantics = [#tpu.dimension_semantics<parallel>, #tpu.dimension_semantics<arbitrary>], iteration_bounds = array<i64: 1, 8>, scalar_prefetch = 0 : i64, scratch_operands = 2 : i64, tpu.core_type = #tpu.core_type<tc>, window_params = [{transform_indices = @transform_0, window_bounds = array<i64: 16, 63>}, {pipeline_mode = #tpu.pipeline_mode<synchronous>, transform_indices = @transform_1, window_bounds = array<i64: 63, 512>}, {transform_indices = @transform_2, window_bounds = array<i64: 1, 256, 256>}, {transform_indices = @transform_3, window_bounds = array<i64: 1, 1, 256>}, {pipeline_mode = #tpu.pipeline_mode<synchronous>, transform_indices = @transform_4, window_bounds = array<i64: 256, 128>}, {pipeline_mode = #tpu.pipeline_mode<synchronous>, transform_indices = @transform_5, window_bounds = array<i64: 256, 1>}, {pipeline_mode = #tpu.pipeline_mode<synchronous>, transform_indices = @transform_6, window_bounds = array<i64: 128, 8>}, {pipeline_mode = #tpu.pipeline_mode<synchronous>, transform_indices = @transform_7, window_bounds = array<i64: 8, 256>}, {transform_indices = @transform_8, window_bounds = array<i64: 16, 12>}]} {
    %c0_i32 = arith.constant 0 : i32
    %0 = arith.cmpi eq, %arg1, %c0_i32 : i32
    %1 = arith.extui %0 : i1 to i32
    %c0_i32_0 = arith.constant 0 : i32
    %2 = arith.cmpi ne, %1, %c0_i32_0 : i32
    scf.if %2 {
      %c0_15 = arith.constant 0 : index
      %c0_16 = arith.constant 0 : index
      %24 = vector.load %arg2[%c0_15, %c0_16] : memref<16x63xf32, #tpu.memory_space<vmem>>, vector<16x63xf32>
      %c0_17 = arith.constant 0 : index
      %c0_18 = arith.constant 0 : index
      %25 = vector.load %arg3[%c0_17, %c0_18] : memref<63x512xbf16, #tpu.memory_space<vmem>>, vector<63x512xbf16>
      %26 = arith.truncf %24 : vector<16x63xf32> to vector<16x63xbf16>
      %cst_19 = arith.constant dense<0.000000e+00> : vector<16x512xf32>
      %27 = tpu.matmul %26, %25, %cst_19 {dimension_numbers = #tpu.dot_dimension_numbers<[1], [0], [0], [1], [0, 0, 1, 1], [], []>} : vector<16x63xbf16>, vector<63x512xbf16>, vector<16x512xf32> -> vector<16x512xf32>
      %28 = vector.extract_strided_slice %27 {offsets = [0, 0], sizes = [16, 256], strides = [1, 1]} : vector<16x512xf32> to vector<16x256xf32>
      %c0_20 = arith.constant 0 : index
      %c0_21 = arith.constant 0 : index
      %29 = vector.load %arg9[%c0_20, %c0_21] : memref<8x256xf32, #tpu.memory_space<vmem>>, vector<1x256xf32>
      %30 = vector.broadcast %29 : vector<1x256xf32> to vector<16x256xf32>
      %31 = arith.addf %28, %30 : vector<16x256xf32>
      %cst_22 = arith.constant 0.000000e+00 : f32
      %32 = vector.broadcast %cst_22 : f32 to vector<16x256xf32>
      %33 = arith.subf %32, %31 : vector<16x256xf32>
      %34 = math.exp %33 : vector<16x256xf32>
      %cst_23 = arith.constant 1.000000e+00 : f32
      %35 = vector.broadcast %cst_23 : f32 to vector<16x256xf32>
      %36 = arith.addf %35, %34 : vector<16x256xf32>
      %cst_24 = arith.constant 1.000000e+00 : f32
      %37 = vector.broadcast %cst_24 : f32 to vector<16x256xf32>
      %38 = arith.divf %37, %36 : vector<16x256xf32>
      %39 = arith.mulf %31, %38 : vector<16x256xf32>
      %c0_25 = arith.constant 0 : index
      %c0_26 = arith.constant 0 : index
      %40 = vector.load %arg11[%c0_25, %c0_26] : memref<16x256xf32, #tpu.memory_space<vmem>>, vector<16x256xf32>
      tpu.vector_store %arg11[%c0_25, %c0_26], %39 {strides = array<i32>} : memref<16x256xf32, #tpu.memory_space<vmem>>, vector<16x256xf32>,
      %41 = vector.extract_strided_slice %27 {offsets = [0, 256], sizes = [16, 256], strides = [1, 1]} : vector<16x512xf32> to vector<16x256xf32>
      %c0_27 = arith.constant 0 : index
      %c0_28 = arith.constant 0 : index
      %42 = vector.load %arg12[%c0_27, %c0_28] : memref<16x256xf32, #tpu.memory_space<vmem>>, vector<16x256xf32>
      tpu.vector_store %arg12[%c0_27, %c0_28], %41 {strides = array<i32>} : memref<16x256xf32, #tpu.memory_space<vmem>>, vector<16x256xf32>,
    } else {
    }
    %c0 = arith.constant 0 : index
    %c0_1 = arith.constant 0 : index
    %3 = vector.load %arg11[%c0, %c0_1] : memref<16x256xf32, #tpu.memory_space<vmem>>, vector<16x256xf32>
    %c3_i32 = arith.constant 3 : i32
    %4 = arith.cmpi eq, %arg1, %c3_i32 : i32
    %cst = arith.constant 1.000000e+00 : f32
    %cst_2 = arith.constant 0.000000e+00 : f32
    %5 = arith.select %4, %cst, %cst_2 : f32
    %c0_3 = arith.constant 0 : index
    %c0_4 = arith.constant 0 : index
    %c0_5 = arith.constant 0 : index
    %6 = vector.load %arg4[%c0_3, %c0_4, %c0_5] : memref<1x256x256xbf16, #tpu.memory_space<vmem>>, vector<1x256x256xbf16>
    %7 = vector.shape_cast %6 : vector<1x256x256xbf16> to vector<256x256xbf16>
    %8 = arith.truncf %3 : vector<16x256xf32> to vector<16x256xbf16>
    %cst_6 = arith.constant dense<0.000000e+00> : vector<16x256xf32>
    %9 = tpu.matmul %8, %7, %cst_6 {dimension_numbers = #tpu.dot_dimension_numbers<[1], [0], [0], [1], [0, 0, 1, 1], [], []>} : vector<16x256xbf16>, vector<256x256xbf16>, vector<16x256xf32> -> vector<16x256xf32>
    %c0_7 = arith.constant 0 : index
    %c0_8 = arith.constant 0 : index
    %c0_9 = arith.constant 0 : index
    %10 = vector.load %arg5[%c0_7, %c0_8, %c0_9] : memref<1x1x256xf32, #tpu.memory_space<vmem>>, vector<1x1x256xf32>
    %11 = vector.shape_cast %10 : vector<1x1x256xf32> to vector<1x256xf32>
    %12 = vector.broadcast %11 : vector<1x256xf32> to vector<16x256xf32>
    %13 = arith.addf %9, %12 : vector<16x256xf32>
    %c0_10 = arith.constant 0 : index
    %c0_11 = arith.constant 0 : index
    %14 = vector.load %arg12[%c0_10, %c0_11] : memref<16x256xf32, #tpu.memory_space<vmem>>, vector<16x256xf32>
    %15 = vector.broadcast %5 : f32 to vector<16x256xf32>
    %16 = arith.mulf %15, %14 : vector<16x256xf32>
    %17 = arith.addf %13, %16 : vector<16x256xf32>
    %c7_i32 = arith.constant 7 : i32
    %18 = arith.cmpi ne, %arg1, %c7_i32 : i32
    %19 = arith.extui %18 : i1 to i32
    %c0_i32_12 = arith.constant 0 : i32
    %20 = arith.cmpi ne, %19, %c0_i32_12 : i32
    scf.if %20 {
      %cst_15 = arith.constant 0.000000e+00 : f32
      %24 = vector.broadcast %cst_15 : f32 to vector<16x256xf32>
      %25 = arith.subf %24, %17 : vector<16x256xf32>
      %26 = math.exp %25 : vector<16x256xf32>
      %cst_16 = arith.constant 1.000000e+00 : f32
      %27 = vector.broadcast %cst_16 : f32 to vector<16x256xf32>
      %28 = arith.addf %27, %26 : vector<16x256xf32>
      %cst_17 = arith.constant 1.000000e+00 : f32
      %29 = vector.broadcast %cst_17 : f32 to vector<16x256xf32>
      %30 = arith.divf %29, %28 : vector<16x256xf32>
      %31 = arith.mulf %17, %30 : vector<16x256xf32>
      %c0_18 = arith.constant 0 : index
      %c0_19 = arith.constant 0 : index
      %32 = vector.load %arg11[%c0_18, %c0_19] : memref<16x256xf32, #tpu.memory_space<vmem>>, vector<16x256xf32>
      tpu.vector_store %arg11[%c0_18, %c0_19], %31 {strides = array<i32>} : memref<16x256xf32, #tpu.memory_space<vmem>>, vector<16x256xf32>,
    } else {
    }
    %c7_i32_13 = arith.constant 7 : i32
    %21 = arith.cmpi eq, %arg1, %c7_i32_13 : i32
    %22 = arith.extui %21 : i1 to i32
    %c0_i32_14 = arith.constant 0 : i32
    %23 = arith.cmpi ne, %22, %c0_i32_14 : i32
    scf.if %23 {
      %c0_15 = arith.constant 0 : index
      %c0_16 = arith.constant 0 : index
      %24 = vector.load %arg7[%c0_15, %c0_16] : memref<256x1xbf16, #tpu.memory_space<vmem>>, vector<256x1xbf16>
      %25 = arith.truncf %3 : vector<16x256xf32> to vector<16x256xbf16>
      %cst_17 = arith.constant dense<0.000000e+00> : vector<16x1xf32>
      %26 = tpu.matmul %25, %24, %cst_17 {dimension_numbers = #tpu.dot_dimension_numbers<[1], [0], [0], [1], [0, 0, 1, 1], [], []>} : vector<16x256xbf16>, vector<256x1xbf16>, vector<16x1xf32> -> vector<16x1xf32>
      %c2 = arith.constant 2 : index
      %c0_18 = arith.constant 0 : index
      %27 = vector.load %arg9[%c2, %c0_18] : memref<8x256xf32, #tpu.memory_space<vmem>>, vector<1x1xf32>
      %28 = vector.broadcast %27 : vector<1x1xf32> to vector<16x1xf32>
      %29 = arith.addf %26, %28 : vector<16x1xf32>
      %c0_19 = arith.constant 0 : index
      %c0_20 = arith.constant 0 : index
      %30 = vector.load %arg6[%c0_19, %c0_20] : memref<256x128xbf16, #tpu.memory_space<vmem>>, vector<256x128xbf16>
      %31 = arith.truncf %17 : vector<16x256xf32> to vector<16x256xbf16>
      %cst_21 = arith.constant dense<0.000000e+00> : vector<16x128xf32>
      %32 = tpu.matmul %31, %30, %cst_21 {dimension_numbers = #tpu.dot_dimension_numbers<[1], [0], [0], [1], [0, 0, 1, 1], [], []>} : vector<16x256xbf16>, vector<256x128xbf16>, vector<16x128xf32> -> vector<16x128xf32>
      %c1 = arith.constant 1 : index
      %c0_22 = arith.constant 0 : index
      %33 = vector.load %arg9[%c1, %c0_22] : memref<8x256xf32, #tpu.memory_space<vmem>>, vector<1x128xf32>
      %34 = vector.broadcast %33 : vector<1x128xf32> to vector<16x128xf32>
      %35 = arith.addf %32, %34 : vector<16x128xf32>
      %cst_23 = arith.constant 0.000000e+00 : f32
      %36 = vector.broadcast %cst_23 : f32 to vector<16x128xf32>
      %37 = arith.subf %36, %35 : vector<16x128xf32>
      %38 = math.exp %37 : vector<16x128xf32>
      %cst_24 = arith.constant 1.000000e+00 : f32
      %39 = vector.broadcast %cst_24 : f32 to vector<16x128xf32>
      %40 = arith.addf %39, %38 : vector<16x128xf32>
      %cst_25 = arith.constant 1.000000e+00 : f32
      %41 = vector.broadcast %cst_25 : f32 to vector<16x128xf32>
      %42 = arith.divf %41, %40 : vector<16x128xf32>
      %43 = arith.mulf %35, %42 : vector<16x128xf32>
      %c0_26 = arith.constant 0 : index
      %c0_27 = arith.constant 0 : index
      %44 = vector.load %arg8[%c0_26, %c0_27] : memref<128x8xbf16, #tpu.memory_space<vmem>>, vector<128x8xbf16>
      %45 = arith.truncf %43 : vector<16x128xf32> to vector<16x128xbf16>
      %cst_28 = arith.constant dense<0.000000e+00> : vector<16x8xf32>
      %46 = tpu.matmul %45, %44, %cst_28 {dimension_numbers = #tpu.dot_dimension_numbers<[1], [0], [0], [1], [0, 0, 1, 1], [], []>} : vector<16x128xbf16>, vector<128x8xbf16>, vector<16x8xf32> -> vector<16x8xf32>
      %c3 = arith.constant 3 : index
      %c0_29 = arith.constant 0 : index
      %47 = vector.load %arg9[%c3, %c0_29] : memref<8x256xf32, #tpu.memory_space<vmem>>, vector<1x8xf32>
      %48 = vector.broadcast %47 : vector<1x8xf32> to vector<16x8xf32>
      %49 = arith.addf %46, %48 : vector<16x8xf32>
      %cst_30 = arith.constant 0.000000e+00 : f32
      %50 = vector.broadcast %cst_30 : f32 to vector<16x8xf32>
      %51 = arith.subf %50, %49 : vector<16x8xf32>
      %52 = math.exp %51 : vector<16x8xf32>
      %cst_31 = arith.constant 1.000000e+00 : f32
      %53 = vector.broadcast %cst_31 : f32 to vector<16x8xf32>
      %54 = arith.addf %53, %52 : vector<16x8xf32>
      %cst_32 = arith.constant 1.000000e+00 : f32
      %55 = vector.broadcast %cst_32 : f32 to vector<16x8xf32>
      %56 = arith.divf %55, %54 : vector<16x8xf32>
      %57 = vector.extract_strided_slice %56 {offsets = [0, 0], sizes = [16, 3], strides = [1, 1]} : vector<16x8xf32> to vector<16x3xf32>
      %cst_33 = arith.constant 1.000000e-01 : f32
      %58 = vector.broadcast %cst_33 : f32 to vector<16x3xf32>
      %59 = arith.mulf %57, %58 : vector<16x3xf32>
      %60 = vector.extract_strided_slice %56 {offsets = [0, 3], sizes = [16, 1], strides = [1, 1]} : vector<16x8xf32> to vector<16x1xf32>
      %61 = vector.extract_strided_slice %56 {offsets = [0, 4], sizes = [16, 1], strides = [1, 1]} : vector<16x8xf32> to vector<16x1xf32>
      %62 = vector.extract_strided_slice %56 {offsets = [0, 5], sizes = [16, 1], strides = [1, 1]} : vector<16x8xf32> to vector<16x1xf32>
      %63 = arith.mulf %60, %60 : vector<16x1xf32>
      %64 = arith.mulf %61, %61 : vector<16x1xf32>
      %65 = arith.addf %63, %64 : vector<16x1xf32>
      %66 = arith.mulf %62, %62 : vector<16x1xf32>
      %67 = arith.addf %65, %66 : vector<16x1xf32>
      %68 = arith.mulf %29, %29 : vector<16x1xf32>
      %69 = arith.addf %67, %68 : vector<16x1xf32>
      %70 = math.sqrt %69 : vector<16x1xf32>
      %cst_34 = arith.constant 9.99999996E-13 : f32
      %71 = vector.broadcast %cst_34 : f32 to vector<16x1xf32>
      %72 = arith.maximumf %70, %71 : vector<16x1xf32>
      %73 = tpu.reciprocal %72 {approx = true} : vector<16x1xf32> -> vector<16x1xf32>
      %74 = arith.mulf %60, %73 : vector<16x1xf32>
      %75 = arith.mulf %61, %73 : vector<16x1xf32>
      %76 = arith.mulf %62, %73 : vector<16x1xf32>
      %77 = arith.mulf %29, %73 : vector<16x1xf32>
      %78 = arith.mulf %74, %74 : vector<16x1xf32>
      %79 = arith.mulf %75, %75 : vector<16x1xf32>
      %80 = arith.addf %78, %79 : vector<16x1xf32>
      %81 = arith.mulf %76, %76 : vector<16x1xf32>
      %82 = arith.addf %80, %81 : vector<16x1xf32>
      %83 = arith.mulf %77, %77 : vector<16x1xf32>
      %84 = arith.addf %82, %83 : vector<16x1xf32>
      %cst_35 = arith.constant 2.000000e+00 : f32
      %85 = vector.broadcast %cst_35 : f32 to vector<16x1xf32>
      %86 = arith.divf %85, %84 : vector<16x1xf32>
      %87 = arith.mulf %76, %76 : vector<16x1xf32>
      %88 = arith.mulf %77, %77 : vector<16x1xf32>
      %89 = arith.addf %87, %88 : vector<16x1xf32>
      %90 = arith.mulf %86, %89 : vector<16x1xf32>
      %cst_36 = arith.constant 1.000000e+00 : f32
      %91 = vector.broadcast %cst_36 : f32 to vector<16x1xf32>
      %92 = arith.subf %91, %90 : vector<16x1xf32>
      %93 = arith.mulf %75, %76 : vector<16x1xf32>
      %94 = arith.mulf %77, %74 : vector<16x1xf32>
      %95 = arith.subf %93, %94 : vector<16x1xf32>
      %96 = arith.mulf %86, %95 : vector<16x1xf32>
      %97 = arith.mulf %75, %77 : vector<16x1xf32>
      %98 = arith.mulf %76, %74 : vector<16x1xf32>
      %99 = arith.addf %97, %98 : vector<16x1xf32>
      %100 = arith.mulf %86, %99 : vector<16x1xf32>
      %101 = arith.mulf %75, %76 : vector<16x1xf32>
      %102 = arith.mulf %77, %74 : vector<16x1xf32>
      %103 = arith.addf %101, %102 : vector<16x1xf32>
      %104 = arith.mulf %86, %103 : vector<16x1xf32>
      %105 = arith.mulf %75, %75 : vector<16x1xf32>
      %106 = arith.mulf %77, %77 : vector<16x1xf32>
      %107 = arith.addf %105, %106 : vector<16x1xf32>
      %108 = arith.mulf %86, %107 : vector<16x1xf32>
      %cst_37 = arith.constant 1.000000e+00 : f32
      %109 = vector.broadcast %cst_37 : f32 to vector<16x1xf32>
      %110 = arith.subf %109, %108 : vector<16x1xf32>
      %111 = arith.mulf %76, %77 : vector<16x1xf32>
      %112 = arith.mulf %75, %74 : vector<16x1xf32>
      %113 = arith.subf %111, %112 : vector<16x1xf32>
      %114 = arith.mulf %86, %113 : vector<16x1xf32>
      %115 = arith.mulf %75, %77 : vector<16x1xf32>
      %116 = arith.mulf %76, %74 : vector<16x1xf32>
      %117 = arith.subf %115, %116 : vector<16x1xf32>
      %118 = arith.mulf %86, %117 : vector<16x1xf32>
      %119 = arith.mulf %76, %77 : vector<16x1xf32>
      %120 = arith.mulf %75, %74 : vector<16x1xf32>
      %121 = arith.addf %119, %120 : vector<16x1xf32>
      %122 = arith.mulf %86, %121 : vector<16x1xf32>
      %123 = arith.mulf %75, %75 : vector<16x1xf32>
      %124 = arith.mulf %76, %76 : vector<16x1xf32>
      %125 = arith.addf %123, %124 : vector<16x1xf32>
      %126 = arith.mulf %86, %125 : vector<16x1xf32>
      %cst_38 = arith.constant 1.000000e+00 : f32
      %127 = vector.broadcast %cst_38 : f32 to vector<16x1xf32>
      %128 = arith.subf %127, %126 : vector<16x1xf32>
      %129 = tpu.concatenate %92, %96, %100, %104, %110, %114, %118, %122, %128, %59 in 1 : vector<16x1xf32>, vector<16x1xf32>, vector<16x1xf32>, vector<16x1xf32>, vector<16x1xf32>, vector<16x1xf32>, vector<16x1xf32>, vector<16x1xf32>, vector<16x1xf32>, vector<16x3xf32> -> vector<16x12xf32>
      %c0_39 = arith.constant 0 : index
      %c0_40 = arith.constant 0 : index
      %130 = vector.load %arg10[%c0_39, %c0_40] : memref<16x12xf32, #tpu.memory_space<vmem>>, vector<16x12xf32>
      tpu.vector_store %arg10[%c0_39, %c0_40], %129 {strides = array<i32>} : memref<16x12xf32, #tpu.memory_space<vmem>>, vector<16x12xf32>,
    } else {
    }
    return
  }
  func.func @transform_0(%arg0: i32, %arg1: i32) -> (i32, i32) {
    %c0_i32 = arith.constant 0 : i32
    %c0_i32_0 = arith.constant 0 : i32
    return %arg0, %c0_i32 : i32, i32
  }
  func.func @transform_1(%arg0: i32, %arg1: i32) -> (i32, i32) {
    %c0_i32 = arith.constant 0 : i32
    %c0_i32_0 = arith.constant 0 : i32
    %c0_i32_1 = arith.constant 0 : i32
    return %c0_i32, %c0_i32_0 : i32, i32
  }
  func.func @transform_2(%arg0: i32, %arg1: i32) -> (i32, i32, i32) {
    %c0_i32 = arith.constant 0 : i32
    %c0_i32_0 = arith.constant 0 : i32
    %c0_i32_1 = arith.constant 0 : i32
    return %arg1, %c0_i32, %c0_i32_0 : i32, i32, i32
  }
  func.func @transform_3(%arg0: i32, %arg1: i32) -> (i32, i32, i32) {
    %c0_i32 = arith.constant 0 : i32
    %c0_i32_0 = arith.constant 0 : i32
    %c0_i32_1 = arith.constant 0 : i32
    return %arg1, %c0_i32, %c0_i32_0 : i32, i32, i32
  }
  func.func @transform_4(%arg0: i32, %arg1: i32) -> (i32, i32) {
    %c0_i32 = arith.constant 0 : i32
    %c0_i32_0 = arith.constant 0 : i32
    %c0_i32_1 = arith.constant 0 : i32
    return %c0_i32, %c0_i32_0 : i32, i32
  }
  func.func @transform_5(%arg0: i32, %arg1: i32) -> (i32, i32) {
    %c0_i32 = arith.constant 0 : i32
    %c0_i32_0 = arith.constant 0 : i32
    %c0_i32_1 = arith.constant 0 : i32
    return %c0_i32, %c0_i32_0 : i32, i32
  }
  func.func @transform_6(%arg0: i32, %arg1: i32) -> (i32, i32) {
    %c0_i32 = arith.constant 0 : i32
    %c0_i32_0 = arith.constant 0 : i32
    %c0_i32_1 = arith.constant 0 : i32
    return %c0_i32, %c0_i32_0 : i32, i32
  }
  func.func @transform_7(%arg0: i32, %arg1: i32) -> (i32, i32) {
    %c0_i32 = arith.constant 0 : i32
    %c0_i32_0 = arith.constant 0 : i32
    %c0_i32_1 = arith.constant 0 : i32
    return %c0_i32, %c0_i32_0 : i32, i32
  }
  func.func @transform_8(%arg0: i32, %arg1: i32) -> (i32, i32) {
    %c0_i32 = arith.constant 0 : i32
    %c0_i32_0 = arith.constant 0 : i32
    return %arg0, %c0_i32 : i32, i32
  }
}

</mosaic_0001>

<llo_original>
// kernel: tpu_custom_call.1
$region0: #{tpu_custom_call.1}
  #allocation0 [shape = 'u32[]', space=smem, size = 0x4, offset = 0x4, fixed_abs, tag = 'smem constant byte address 0x4 - core index']
  #allocation1 [shape = 'u32[144,128]{1,0:T(1,128)}', space=vmem, size = 0x12000, scoped, tag = 'internal scratch']
  #allocation2 [shape = 'f32[16,256]{1,0:T(8,128)}', space=vmem, size = 0x4000, scoped, tag = 'scratch operand']
  #allocation3 [shape = 'f32[16,256]{1,0:T(8,128)}', space=vmem, size = 0x4000, scoped, tag = 'scratch operand']
  %s0 = inlined_call_operand.vmem [shape: f32[16,63], index: 0, kind: input, shape index: {}]
  %s1 = inlined_call_operand.vmem [shape: bf16[63,512], index: 1, kind: input, shape index: {}]
  %s2 = inlined_call_operand.hbm [shape: bf16[8,256,256], index: 2, kind: input, shape index: {}]
  %s3 = inlined_call_operand.vmem [shape: f32[8,1,256], index: 3, kind: input, shape index: {}]
  %s4 = inlined_call_operand.hbm [shape: bf16[256,128], index: 4, kind: input, shape index: {}]
  %s5 = inlined_call_operand.vmem [shape: bf16[256,1], index: 5, kind: input, shape index: {}]
  %s6 = inlined_call_operand.vmem [shape: bf16[128,8], index: 6, kind: input, shape index: {}]
  %s7 = inlined_call_operand.vmem [shape: f32[8,256], index: 7, kind: input, shape index: {}]
  %s8 = inlined_call_operand.hbm [shape: f32[16,12], index: 8, kind: output, shape index: {}]
  %s9 = sld [smem:[#allocation0]]
  $region85: #{tpu_custom_call.1} parent=0
    _
  %s11 = ssub.s32 1, %s9
  %s12 = scalar_select 0, %s11, %s9
  $region1: #{tpu_custom_call.1} parent=0
    #allocation4 [shape = 'u8[262144]{0}', space=vmem, size = 0x40000, scoped, tag = 'input window, operand 2']
    #allocation5 [shape = 's32[2]{0}', space=sflag, size = 0x8, scoped, tag = 'scoped memory for tpu_custom_call.1']
    #allocation6 [shape = 's32[2]{0}', space=sflag, size = 0x8, scoped, tag = 'scoped memory for tpu_custom_call.1']
    #allocation7 [shape = 'u8[65536]{0}', space=vmem, size = 0x10000, scoped, tag = 'input window, operand 4, single buffered']
    #allocation8 [shape = 's32[1]{0}', space=sflag, size = 0x4, scoped, tag = 'scoped memory for tpu_custom_call.1']
    #allocation9 [shape = 'u8[8192]{0}', space=vmem, size = 0x2000, scoped, tag = 'output window, operand 0, single buffered']
    %13 = vsyncpa [#allocation5], 0
    %s14 = scalar_lea.sflag [#allocation5], 1
    %15 = vsyncpa %s14, 0
    %16 = vsyncpa [#allocation8], 0
    %17 = vsyncpa [#allocation6], 0
    loop: start=0, step=1, limit=10
    $region2: #{tpu_custom_call.1} parent=1 // loop_pre_header
      _
    $region3: #{tpu_custom_call.1} parent=1 // loop_header
      %s19 = sphi 0, %s23
      %p20 = scmp.ge.s32.totalorder %s19, 10
      %s26 = sphi 0, %s38
      %s27 = sphi 0, %s34
      %s28 = sphi 0, %s26
      %s29 = sphi 0, %s27
      %s30 = sphi 0, %s28
      %s31 = sphi 0, %s29
      %s41 = sphi 0, %s43
      %s44 = sphi 0, %s41
      %s45 = sphi 0, %s44
      %s61 = sphi 0, %s45
      %s65 = sphi 0, %s65
      %s67 = sphi 0, %s65
      %s68 = sphi 0, %s67
      %s82 = sphi 0, %s68
      %s88 = sphi 0, %s90
      %s91 = sphi 0, %s88
      %s92 = sphi 0, %s91
      %s108 = sphi 0, %s92
      %s114 = sphi 0, %s116
      %s117 = sphi 0, %s114
      %s118 = sphi 0, %s117
      %s134 = sphi 0, %s118
      %s138 = sphi 0, %s138
      %s140 = sphi 0, %s138
      %s141 = sphi 0, %s140
      %s155 = sphi 0, %s141
      %s159 = sphi 0, %s159
      %s161 = sphi 0, %s159
      %s162 = sphi 0, %s161
      %s176 = sphi 0, %s162
      %s180 = sphi 0, %s180
      %s182 = sphi 0, %s180
      %s183 = sphi 0, %s182
      %s197 = sphi 0, %s183
      %s201 = sphi 0, %s201
      %s203 = sphi 0, %s201
      %s204 = sphi 0, %s203
      %s218 = sphi 0, %s204
      %s224 = sphi 0, %s226
      %s227 = sphi 0, %s224
      %s228 = sphi 0, %s227
      %s244 = sphi 0, %s228
    $region4: #{tpu_custom_call.1} parent=1 // loop_header_branch
      %22 = sbr.rel (%p20) target = $region8
    $region5: #{tpu_custom_call.1} parent=1 // loop_body
      %s24 = ssub.s32 %s19, 1
      %s25 = ssub.s32 %s19, 2
      %s32 = sadd.s32 1, %s27
      %p33 = scmp.ge.s32.totalorder %s32, 8
      %s34 = scalar_select %p33, 0, %s32
      %s35 = sadd.s32 1, %s26
      %s36 = scalar_select %p33, %s35, %s26
      %p37 = scmp.ge.s32.totalorder %s36, 1
      %s38 = scalar_select %p37, 0, %s36
      %s39 = ssub.s32 %s26, %s38
      %p40 = scmp.eq.s32.totalorder %s39, 0
      %s42 = sadd.s32 %s41, 1
      %s43 = scalar_select %p40, %s41, %s42
      %p46 = pneg %p40
      %p47 = scmp.eq.s32.totalorder %s19, 7
      %p48 = por %p46, %p47
      %p49 = scmp.ne.s32.totalorder %s41, %s44
      %p50 = scmp.eq.s32.totalorder %s19, 0
      %p51 = por %p49, %p50
      %p52 = scmp.ne.s32.totalorder %s41, %s44
      %p53 = scmp.eq.s32.totalorder %s24, 7
      %p54 = por %p52, %p53
      %p55 = scmp.ne.s32.totalorder %s44, %s45
      %p56 = scmp.eq.s32.totalorder %s24, 0
      %p57 = por %p55, %p56
      %p58 = scmp.ne.s32.totalorder %s44, %s45
      %p59 = scmp.eq.s32.totalorder %s25, 7
      %p60 = por %p58, %p59
      %p62 = scmp.ne.s32.totalorder %s45, %s61
      %p63 = scmp.eq.s32.totalorder %s25, 0
      %p64 = por %p62, %p63
      %s66 = sadd.s32 %s65, 1
      %p69 = scmp.eq.s32.totalorder %s19, 7
      %p70 = scmp.ne.s32.totalorder %s65, %s67
      %p71 = scmp.eq.s32.totalorder %s19, 0
      %p72 = por %p70, %p71
      %p73 = scmp.ne.s32.totalorder %s65, %s67
      %p74 = scmp.eq.s32.totalorder %s24, 7
      %p75 = por %p73, %p74
      %p76 = scmp.ne.s32.totalorder %s67, %s68
      %p77 = scmp.eq.s32.totalorder %s24, 0
      %p78 = por %p76, %p77
      %p79 = scmp.ne.s32.totalorder %s67, %s68
      %p80 = scmp.eq.s32.totalorder %s25, 7
      %p81 = por %p79, %p80
      %p83 = scmp.ne.s32.totalorder %s68, %s82
      %p84 = scmp.eq.s32.totalorder %s25, 0
      %p85 = por %p83, %p84
      %s86 = ssub.s32 %s27, %s34
      %p87 = scmp.eq.s32.totalorder %s86, 0
      %s89 = sadd.s32 %s88, 1
      %s90 = scalar_select %p87, %s88, %s89
      %p93 = pneg %p87
      %p94 = scmp.eq.s32.totalorder %s19, 7
      %p95 = por %p93, %p94
      %p96 = scmp.ne.s32.totalorder %s88, %s91
      %p97 = scmp.eq.s32.totalorder %s19, 0
      %p98 = por %p96, %p97
      %p99 = scmp.ne.s32.totalorder %s88, %s91
      %p100 = scmp.eq.s32.totalorder %s24, 7
      %p101 = por %p99, %p100
      %p102 = scmp.ne.s32.totalorder %s91, %s92
      %p103 = scmp.eq.s32.totalorder %s24, 0
      %p104 = por %p102, %p103
      %p105 = scmp.ne.s32.totalorder %s91, %s92
      %p106 = scmp.eq.s32.totalorder %s25, 7
      %p107 = por %p105, %p106
      %p109 = scmp.ne.s32.totalorder %s92, %s108
      %p110 = scmp.eq.s32.totalorder %s25, 0
      %p111 = por %p109, %p110
      %s112 = ssub.s32 %s27, %s34
      %p113 = scmp.eq.s32.totalorder %s112, 0
      %s115 = sadd.s32 %s114, 1
      %s116 = scalar_select %p113, %s114, %s115
      %p119 = pneg %p113
      %p120 = scmp.eq.s32.totalorder %s19, 7
      %p121 = por %p119, %p120
      %p122 = scmp.ne.s32.totalorder %s114, %s117
      %p123 = scmp.eq.s32.totalorder %s19, 0
      %p124 = por %p122, %p123
      %p125 = scmp.ne.s32.totalorder %s114, %s117
      %p126 = scmp.eq.s32.totalorder %s24, 7
      %p127 = por %p125, %p126
      %p128 = scmp.ne.s32.totalorder %s117, %s118
      %p129 = scmp.eq.s32.totalorder %s24, 0
      %p130 = por %p128, %p129
      %p131 = scmp.ne.s32.totalorder %s117, %s118
      %p132 = scmp.eq.s32.totalorder %s25, 7
      %p133 = por %p131, %p132
      %p135 = scmp.ne.s32.totalorder %s118, %s134
      %p136 = scmp.eq.s32.totalorder %s25, 0
      %p137 = por %p135, %p136
      %s139 = sadd.s32 %s138, 1
      %p142 = scmp.eq.s32.totalorder %s19, 7
      %p143 = scmp.ne.s32.totalorder %s138, %s140
      %p144 = scmp.eq.s32.totalorder %s19, 0
      %p145 = por %p143, %p144
      %p146 = scmp.ne.s32.totalorder %s138, %s140
      %p147 = scmp.eq.s32.totalorder %s24, 7
      %p148 = por %p146, %p147
      %p149 = scmp.ne.s32.totalorder %s140, %s141
      %p150 = scmp.eq.s32.totalorder %s24, 0
      %p151 = por %p149, %p150
      %p152 = scmp.ne.s32.totalorder %s140, %s141
      %p153 = scmp.eq.s32.totalorder %s25, 7
      %p154 = por %p152, %p153
      %p156 = scmp.ne.s32.totalorder %s141, %s155
      %p157 = scmp.eq.s32.totalorder %s25, 0
      %p158 = por %p156, %p157
      %s160 = sadd.s32 %s159, 1
      %p163 = scmp.eq.s32.totalorder %s19, 7
      %p164 = scmp.ne.s32.totalorder %s159, %s161
      %p165 = scmp.eq.s32.totalorder %s19, 0
      %p166 = por %p164, %p165
      %p167 = scmp.ne.s32.totalorder %s159, %s161
      %p168 = scmp.eq.s32.totalorder %s24, 7
      %p169 = por %p167, %p168
      %p170 = scmp.ne.s32.totalorder %s161, %s162
      %p171 = scmp.eq.s32.totalorder %s24, 0
      %p172 = por %p170, %p171
      %p173 = scmp.ne.s32.totalorder %s161, %s162
      %p174 = scmp.eq.s32.totalorder %s25, 7
      %p175 = por %p173, %p174
      %p177 = scmp.ne.s32.totalorder %s162, %s176
      %p178 = scmp.eq.s32.totalorder %s25, 0
      %p179 = por %p177, %p178
      %s181 = sadd.s32 %s180, 1
      %p184 = scmp.eq.s32.totalorder %s19, 7
      %p185 = scmp.ne.s32.totalorder %s180, %s182
      %p186 = scmp.eq.s32.totalorder %s19, 0
      %p187 = por %p185, %p186
      %p188 = scmp.ne.s32.totalorder %s180, %s182
      %p189 = scmp.eq.s32.totalorder %s24, 7
      %p190 = por %p188, %p189
      %p191 = scmp.ne.s32.totalorder %s182, %s183
      %p192 = scmp.eq.s32.totalorder %s24, 0
      %p193 = por %p191, %p192
      %p194 = scmp.ne.s32.totalorder %s182, %s183
      %p195 = scmp.eq.s32.totalorder %s25, 7
      %p196 = por %p194, %p195
      %p198 = scmp.ne.s32.totalorder %s183, %s197
      %p199 = scmp.eq.s32.totalorder %s25, 0
      %p200 = por %p198, %p199
      %s202 = sadd.s32 %s201, 1
      %p205 = scmp.eq.s32.totalorder %s19, 7
      %p206 = scmp.ne.s32.totalorder %s201, %s203
      %p207 = scmp.eq.s32.totalorder %s19, 0
      %p208 = por %p206, %p207
      %p209 = scmp.ne.s32.totalorder %s201, %s203
      %p210 = scmp.eq.s32.totalorder %s24, 7
      %p211 = por %p209, %p210
      %p212 = scmp.ne.s32.totalorder %s203, %s204
      %p213 = scmp.eq.s32.totalorder %s24, 0
      %p214 = por %p212, %p213
      %p215 = scmp.ne.s32.totalorder %s203, %s204
      %p216 = scmp.eq.s32.totalorder %s25, 7
      %p217 = por %p215, %p216
      %p219 = scmp.ne.s32.totalorder %s204, %s218
      %p220 = scmp.eq.s32.totalorder %s25, 0
      %p221 = por %p219, %p220
      %s222 = ssub.s32 %s26, %s38
      %p223 = scmp.eq.s32.totalorder %s222, 0
      %s225 = sadd.s32 %s224, 1
      %s226 = scalar_select %p223, %s224, %s225
      %p229 = pneg %p223
      %p230 = scmp.eq.s32.totalorder %s19, 7
      %p231 = por %p229, %p230
      %p232 = scmp.ne.s32.totalorder %s224, %s227
      %p233 = scmp.eq.s32.totalorder %s19, 0
      %p234 = por %p232, %p233
      %p235 = scmp.ne.s32.totalorder %s224, %s227
      %p236 = scmp.eq.s32.totalorder %s24, 7
      %p237 = por %p235, %p236
      %p238 = scmp.ne.s32.totalorder %s227, %s228
      %p239 = scmp.eq.s32.totalorder %s24, 0
      %p240 = por %p238, %p239
      %p241 = scmp.ne.s32.totalorder %s227, %s228
      %p242 = scmp.eq.s32.totalorder %s25, 7
      %p243 = por %p241, %p242
      %p245 = scmp.ne.s32.totalorder %s228, %s244
      %p246 = scmp.eq.s32.totalorder %s25, 0
      %p247 = por %p245, %p246
      %p248 = scmp.le.s32.totalorder 1, %s19
      %p249 = scmp.lt.s32.totalorder %s19, 9
      %p250 = pnand %p248, %p249
      %p251 = pneg %p250
      // Predicated region
      $region9: #{tpu_custom_call.1} parent=5 // pred_check
        _
      $region10: #{tpu_custom_call.1} parent=5 // pred_check_branch
        %253 = sbr.rel (%p250) target = $region12
      $region11: #{tpu_custom_call.1} parent=5 // pred_region
        %s254 = ssub.s32 %s19, 1
        // Predicated region
        $region13: #{tpu_custom_call.1} parent=11 // pred_check
          %p255 = pneg %p57
        $region14: #{tpu_custom_call.1} parent=11 // pred_check_branch
          %257 = sbr.rel (%p255) target = $region16
        $region15: #{tpu_custom_call.1} parent=11 // pred_region
          %s258 = smul.u32 2, %s28
          %p259 = scmp.lt.s32.totalorder %s258, 1
          %s260 = scalar_select %p259, %s258, 1
          %s261 = smul.addr %s260, 8
          %s262 = scalar_lea.vmem %s0, %s261
          %s263 = smul.u32 2, %s28
        $region16: #{tpu_custom_call.1} parent=11 // pred_fallthru
          _
        // Predicated region
        $region17: #{tpu_custom_call.1} parent=11 // pred_check
          %p264 = pneg %p78
        $region18: #{tpu_custom_call.1} parent=11 // pred_check_branch
          %266 = sbr.rel (%p264) target = $region20
        $region19: #{tpu_custom_call.1} parent=11 // pred_region
          _
        $region20: #{tpu_custom_call.1} parent=11 // pred_fallthru
          _
        // Predicated region
        $region21: #{tpu_custom_call.1} parent=11 // pred_check
          %p267 = pneg %p151
        $region22: #{tpu_custom_call.1} parent=11 // pred_check_branch
          %269 = sbr.rel (%p267) target = $region24
        $region23: #{tpu_custom_call.1} parent=11 // pred_region
          %s271 = ssub.s32 2048, 2048
          %272 = vsyncadd [#allocation8], %s271
          %s273 = sshll.u32 [#allocation7], 4
          %s274 = int_to_ptr.vmem [resolvable:$true] %s273
          %279 = dma.hbm_to_vmem [thread:$0]  %s4, 2048, %s274, [#allocation8], 64, 64, 4
        $region24: #{tpu_custom_call.1} parent=11 // pred_fallthru
          _
        // Predicated region
        $region25: #{tpu_custom_call.1} parent=11 // pred_check
          %p280 = pneg %p172
        $region26: #{tpu_custom_call.1} parent=11 // pred_check_branch
          %282 = sbr.rel (%p280) target = $region28
        $region27: #{tpu_custom_call.1} parent=11 // pred_region
          _
        $region28: #{tpu_custom_call.1} parent=11 // pred_fallthru
          _
        // Predicated region
        $region29: #{tpu_custom_call.1} parent=11 // pred_check
          %p283 = pneg %p193
        $region30: #{tpu_custom_call.1} parent=11 // pred_check_branch
          %285 = sbr.rel (%p283) target = $region32
        $region31: #{tpu_custom_call.1} parent=11 // pred_region
          _
        $region32: #{tpu_custom_call.1} parent=11 // pred_fallthru
          _
        // Predicated region
        $region33: #{tpu_custom_call.1} parent=11 // pred_check
          %p286 = pneg %p214
        $region34: #{tpu_custom_call.1} parent=11 // pred_check_branch
          %288 = sbr.rel (%p286) target = $region36
        $region35: #{tpu_custom_call.1} parent=11 // pred_region
          _
        $region36: #{tpu_custom_call.1} parent=11 // pred_fallthru
          _
      $region12: #{tpu_custom_call.1} parent=5 // pred_fallthru
        _
      %p289 = scmp.lt.s32.totalorder %s19, 8
      // Predicated region
      $region37: #{tpu_custom_call.1} parent=5 // pred_check
        %p290 = pneg %p289
      $region38: #{tpu_custom_call.1} parent=5 // pred_check_branch
        %292 = sbr.rel (%p290) target = $region40
      $region39: #{tpu_custom_call.1} parent=5 // pred_region
        // Predicated region
        $region41: #{tpu_custom_call.1} parent=39 // pred_check
          %p293 = pneg %p98
        $region42: #{tpu_custom_call.1} parent=39 // pred_check_branch
          %295 = sbr.rel (%p293) target = $region44
        $region43: #{tpu_custom_call.1} parent=39 // pred_region
          %s296 = sand.u32 %s88, 1
          %s297 = scalar_lea.sflag [#allocation5], %s296
          %s298 = sand.u32 %s88, 1
          %s299 = smul.addr %s298, 256
          %s300 = scalar_lea.vmem [#allocation4], %s299
          %s302 = ssub.s32 4096, 4096
          %303 = vsyncadd %s297, %s302
          %s304 = smul.addr %s27, 64
          %s305 = smul.addr %s304, 64
          %s306 = scalar_lea.hbm %s2, %s305
          %s307 = sshll.u32 %s300, 4
          %s308 = int_to_ptr.vmem [resolvable:$true] %s307
          %313 = dma.hbm_to_vmem [thread:$0]  %s306, 4096, %s308, %s297, 128, 128, 8
        $region44: #{tpu_custom_call.1} parent=39 // pred_fallthru
          _
        // Predicated region
        $region45: #{tpu_custom_call.1} parent=39 // pred_check
          %p314 = pneg %p124
        $region46: #{tpu_custom_call.1} parent=39 // pred_check_branch
          %316 = sbr.rel (%p314) target = $region48
        $region47: #{tpu_custom_call.1} parent=39 // pred_region
          %p317 = scmp.lt.s32.totalorder %s27, 7
          %s318 = scalar_select %p317, %s27, 7
          %s319 = smul.addr %s318, 2
          %s320 = scalar_lea.vmem %s3, %s319
        $region48: #{tpu_custom_call.1} parent=39 // pred_fallthru
          _
      $region40: #{tpu_custom_call.1} parent=5 // pred_fallthru
        _
      %p321 = scmp.le.s32.totalorder 1, %s19
      %p322 = scmp.lt.s32.totalorder %s19, 9
      %p323 = pnand %p321, %p322
      %p324 = pneg %p323
      // Predicated region
      $region49: #{tpu_custom_call.1} parent=5 // pred_check
        _
      $region50: #{tpu_custom_call.1} parent=5 // pred_check_branch
        %326 = sbr.rel (%p323) target = $region52
      $region51: #{tpu_custom_call.1} parent=5 // pred_region
        %s327 = ssub.s32 %s19, 1
        %s328 = sand.u32 %s91, 1
        %s329 = scalar_lea.sflag [#allocation5], %s328
        %s330 = sand.u32 %s91, 1
        %s331 = smul.addr %s330, 256
        %s332 = scalar_lea.vmem [#allocation4], %s331
        // Predicated region
        $region53: #{tpu_custom_call.1} parent=51 // pred_check
          %p333 = pneg %p104
        $region54: #{tpu_custom_call.1} parent=51 // pred_check_branch
          %335 = sbr.rel (%p333) target = $region56
        $region55: #{tpu_custom_call.1} parent=51 // pred_region
          %336 = dma.done %s329, 4096
        $region56: #{tpu_custom_call.1} parent=51 // pred_fallthru
          _
        // Predicated region
        $region57: #{tpu_custom_call.1} parent=51 // pred_check
          %p337 = pneg %p151
        $region58: #{tpu_custom_call.1} parent=51 // pred_check_branch
          %339 = sbr.rel (%p337) target = $region60
        $region59: #{tpu_custom_call.1} parent=51 // pred_region
          %340 = dma.done [#allocation8], 2048
        $region60: #{tpu_custom_call.1} parent=51 // pred_fallthru
          _
        %s341 = smul.u32 2, %s28
        %p342 = scmp.lt.s32.totalorder %s341, 1
        %s343 = scalar_select %p342, %s341, 1
        %s344 = smul.addr %s343, 8
        %s345 = scalar_lea.vmem %s0, %s344
        %p346 = pneg %p57
        %p347 = pneg %p54
        %p348 = pneg %p78
        %p349 = pneg %p75
        %s350 = sand.u32 %s91, 1
        %s351 = scalar_lea.sflag [#allocation5], %s350
        %s352 = sand.u32 %s91, 1
        %s353 = smul.addr %s352, 256
        %s354 = scalar_lea.vmem [#allocation4], %s353
        %p355 = pneg %p104
        %p356 = pneg %p101
        %p357 = scmp.lt.s32.totalorder %s29, 7
        %s358 = scalar_select %p357, %s29, 7
        %s359 = smul.addr %s358, 2
        %s360 = scalar_lea.vmem %s3, %s359
        %p361 = pneg %p130
        %p362 = pneg %p127
        %p363 = pneg %p151
        %p364 = pneg %p148
        %p365 = pneg %p172
        %p366 = pneg %p169
        %p367 = pneg %p193
        %p368 = pneg %p190
        %p369 = pneg %p214
        %p370 = pneg %p211
        %p371 = pneg %p240
        %p372 = pneg %p237
        %s373 = smul.u32 2, %s28
        %p374 = scmp.lt.s32.totalorder %s373, 1
        %s375 = scalar_select %p374, %s373, 1
        %s376 = smul.addr %s375, 8
        %s377 = scalar_lea.vmem %s0, %s376
        %s378 = smul.u32 2, %s28
        %p379 = scmp.lt.s32.totalorder %s29, 7
        %s380 = scalar_select %p379, %s29, 7
        %s381 = smul.addr %s380, 2
        %s382 = scalar_lea.vmem %s3, %s381
        %s383 = smul.u32 2, %s28
        %p385 = scmp.eq.s32.totalorder %s29, 0
        // Predicated region
        $region61: #{tpu_custom_call.1} parent=51 // pred_check
          %p386 = pneg %p385
        $region62: #{tpu_custom_call.1} parent=51 // pred_check_branch
          %388 = sbr.rel (%p386) target = $region64
        $region63: #{tpu_custom_call.1} parent=51 // pred_region
          %v389 = vld [vmem:[%s377] sm:$0xff]
          %v390 = vld [vmem:[%s377 + $0x8] sm:$0xff]
          %v391 = vld [vmem:[%s1] sm:$0xff]
          %v392 = vld [vmem:[%s1 + $0x8] sm:$0xff]
          %v393 = vld [vmem:[%s1 + $0x10] sm:$0xff]
          %v394 = vld [vmem:[%s1 + $0x18] sm:$0xff]
          %v395 = vld [vmem:[%s1 + $0x20] sm:$0xff]
          %v396 = vld [vmem:[%s1 + $0x28] sm:$0xff]
          %v397 = vld [vmem:[%s1 + $0x30] sm:$0xff]
          %v398 = vld [vmem:[%s1 + $0x38] sm:$0xff]
          %v399 = vld [vmem:[%s1 + $0x40] sm:$0xff]
          %v400 = vld [vmem:[%s1 + $0x48] sm:$0xff]
          %v401 = vld [vmem:[%s1 + $0x50] sm:$0xff]
          %v402 = vld [vmem:[%s1 + $0x58] sm:$0xff]
          %v403 = vld [vmem:[%s1 + $0x60] sm:$0xff]
          %v404 = vld [vmem:[%s1 + $0x68] sm:$0xff]
          %v405 = vld [vmem:[%s1 + $0x70] sm:$0xff]
          %v406 = vld [vmem:[%s1 + $0x78] sm:$0xff]
          %v407 = vpack.c.bf16 %v390, %v389
          %v424 = vunpack.c.l.b16 %v391
          %v425 = vunpack.c.h.b16 %v391
          %v426 = vunpack.c.l.b16 %v392
          %v427 = vunpack.c.h.b16 %v392
          %v428 = vunpack.c.l.b16 %v393
          %v429 = vunpack.c.h.b16 %v393
          %v430 = vunpack.c.l.b16 %v394
          %v431 = vunpack.c.h.b16 %v394
          %v432 = vunpack.c.l.b16 %v395
          %v433 = vunpack.c.h.b16 %v395
          %v434 = vunpack.c.l.b16 %v396
          %v435 = vunpack.c.h.b16 %v396
          %v436 = vunpack.c.l.b16 %v397
          %v437 = vunpack.c.h.b16 %v397
          %v438 = vunpack.c.l.b16 %v398
          %v439 = vunpack.c.h.b16 %v398
          %v440 = vunpack.c.l.b16 %v399
          %v441 = vunpack.c.h.b16 %v399
          %v442 = vunpack.c.l.b16 %v400
          %v443 = vunpack.c.h.b16 %v400
          %v444 = vunpack.c.l.b16 %v401
          %v445 = vunpack.c.h.b16 %v401
          %v446 = vunpack.c.l.b16 %v402
          %v447 = vunpack.c.h.b16 %v402
          %v448 = vunpack.c.l.b16 %v403
          %v449 = vunpack.c.h.b16 %v403
          %v450 = vunpack.c.l.b16 %v404
          %v451 = vunpack.c.h.b16 %v404
          %v452 = vunpack.c.l.b16 %v405
          %v453 = vunpack.c.h.b16 %v405
          %v454 = vunpack.c.l.b16 %v406
          %v455 = vunpack.c.h.b16 %v406
          %v456 = vpack.c.b16 %v428, %v424
          %v457 = vpack.c.b16 %v429, %v425
          %v458 = vpack.c.b16 %v430, %v426
          %v459 = vpack.c.b16 %v431, %v427
          %v460 = vpack.c.b16 %v436, %v432
          %v461 = vpack.c.b16 %v437, %v433
          %v462 = vpack.c.b16 %v438, %v434
          %v463 = vpack.c.b16 %v439, %v435
          %v464 = vpack.c.b16 %v444, %v440
          %v465 = vpack.c.b16 %v445, %v441
          %v466 = vpack.c.b16 %v446, %v442
          %v467 = vpack.c.b16 %v447, %v443
          %v468 = vpack.c.b16 %v452, %v448
          %v469 = vpack.c.b16 %v453, %v449
          %v470 = vpack.c.b16 %v454, %v450
          %v471 = vpack.c.b16 %v455, %v451
          %vm484 = vcmask 515072
          %v486 = vsel %vm484, %v407, 0
          %vm488 = vcmask 1046528
          %vm489 = vcmask 1047552
          %v490 = vsel %vm488, 4294967295, 65535
          %v491 = vsel %vm489, %v490, 0
          %v493 = vand.u32 %v468, %v491
          %v496 = vand.u32 %v469, %v491
          %v499 = vand.u32 %v470, %v491
          %v502 = vand.u32 %v471, %v491
          %504 = vmatprep.subr.bf16.mxu0 %v457
          %505 = vmatpush1.bf16.msra.mxu0 %v456
          %506 = vmatprep.subr.bf16.mxu0 %v461
          %507 = vmatpush1.bf16.msra.mxu0 %v460
          %508 = vmatprep.subr.bf16.mxu0 %v465
          %509 = vmatpush1.bf16.msra.mxu0 %v464
          %510 = vmatprep.subr.bf16.mxu0 %v496
          %511 = vmatpush1.bf16.msra.mxu0 %v493
          %512 = vmatprep.subr.bf16.mxu0 0
          %513 = vmatpush1.bf16.msra.mxu0 0
          %514 = vmatprep.subr.bf16.mxu0 0
          %515 = vmatpush1.bf16.msra.mxu0 0
          %516 = vmatprep.subr.bf16.mxu0 0
          %517 = vmatpush1.bf16.msra.mxu0 0
          %518 = vmatprep.subr.bf16.mxu0 0
          %519 = vmatpush1.bf16.msra.mxu0 0
          %520 = vmatprep.subr.bf16.mxu0 0
          %521 = vmatpush1.bf16.msra.mxu0 0
          %522 = vmatprep.subr.bf16.mxu0 0
          %523 = vmatpush1.bf16.msra.mxu0 0
          %524 = vmatprep.subr.bf16.mxu0 0
          %525 = vmatpush1.bf16.msra.mxu0 0
          %526 = vmatprep.subr.bf16.mxu0 0
          %527 = vmatpush1.bf16.msra.mxu0 0
          %528 = vmatprep.subr.bf16.mxu0 0
          %529 = vmatpush1.bf16.msra.mxu0 0
          %530 = vmatprep.subr.bf16.mxu0 0
          %531 = vmatpush1.bf16.msra.mxu0 0
          %532 = vmatprep.subr.bf16.mxu0 0
          %533 = vmatpush1.bf16.msra.mxu0 0
          %534 = vmatprep.subr.bf16.mxu0 0
          %535 = vmatpush1.bf16.msra.mxu0 0
          %536 = vmatprep.mubr.bf16.mxu0 0
          %537 = vmatmul.mubr.bf16.gmra.mrb[0].mxu0 %v486
          %v538 = vpop.f32.mrb[0].mxu0
          %v539 = vadd.f32 0.0, %v538
          %v540 = vpop.f32.mrb[0].mxu0
          %v541 = vadd.f32 0.0, %v540
          %v542 = vpop.f32.mrb[0].mxu0
          %v543 = vadd.f32 0.0, %v542
          %v544 = vpop.f32.mrb[0].mxu0
          %v545 = vadd.f32 0.0, %v544
          %546 = vdwg.mxu0
          %547 = vmatprep.subr.bf16.mxu0 %v459
          %548 = vmatpush1.bf16.msra.mxu0 %v458
          %549 = vmatprep.subr.bf16.mxu0 %v463
          %550 = vmatpush1.bf16.msra.mxu0 %v462
          %551 = vmatprep.subr.bf16.mxu0 %v467
          %552 = vmatpush1.bf16.msra.mxu0 %v466
          %553 = vmatprep.subr.bf16.mxu0 %v502
          %554 = vmatpush1.bf16.msra.mxu0 %v499
          %555 = vmatprep.subr.bf16.mxu0 0
          %556 = vmatpush1.bf16.msra.mxu0 0
          %557 = vmatprep.subr.bf16.mxu0 0
          %558 = vmatpush1.bf16.msra.mxu0 0
          %559 = vmatprep.subr.bf16.mxu0 0
          %560 = vmatpush1.bf16.msra.mxu0 0
          %561 = vmatprep.subr.bf16.mxu0 0
          %562 = vmatpush1.bf16.msra.mxu0 0
          %563 = vmatprep.subr.bf16.mxu0 0
          %564 = vmatpush1.bf16.msra.mxu0 0
          %565 = vmatprep.subr.bf16.mxu0 0
          %566 = vmatpush1.bf16.msra.mxu0 0
          %567 = vmatprep.subr.bf16.mxu0 0
          %568 = vmatpush1.bf16.msra.mxu0 0
          %569 = vmatprep.subr.bf16.mxu0 0
          %570 = vmatpush1.bf16.msra.mxu0 0
          %571 = vmatprep.subr.bf16.mxu0 0
          %572 = vmatpush1.bf16.msra.mxu0 0
          %573 = vmatprep.subr.bf16.mxu0 0
          %574 = vmatpush1.bf16.msra.mxu0 0
          %575 = vmatprep.subr.bf16.mxu0 0
          %576 = vmatpush1.bf16.msra.mxu0 0
          %577 = vmatprep.subr.bf16.mxu0 0
          %578 = vmatpush1.bf16.msra.mxu0 0
          %579 = vmatprep.mubr.bf16.mxu0 0
          %580 = vmatmul.mubr.bf16.gmra.mrb[0].mxu0 %v486
          %v581 = vpop.f32.mrb[0].mxu0
          %v582 = vadd.f32 0.0, %v581
          %v583 = vpop.f32.mrb[0].mxu0
          %v584 = vadd.f32 0.0, %v583
          %v585 = vpop.f32.mrb[0].mxu0
          %v586 = vadd.f32 0.0, %v585
          %v587 = vpop.f32.mrb[0].mxu0
          %v588 = vadd.f32 0.0, %v587
          %589 = vdwg.mxu0
          %v590 = vld [vmem:[%s7] ss:$8 sm:$0x3]
          %v592 = vlaneseq
          %v593 = vshrl.u32 %v592, 7
          %v594 = vsub.s32 0, %v593
          %v595 = vrot.slane %v590, %v594
          %v596 = vlaneseq
          %v597 = vshrl.u32 %v596, 7
          %v598 = vsub.s32 1, %v597
          %v599 = vrot.slane %v590, %v598
          %v602 = vadd.f32 %v539, %v595
          %v603 = vadd.f32 %v541, %v599
          %v604 = vadd.f32 %v543, %v595
          %v605 = vadd.f32 %v545, %v599
          %v606 = vsub.f32 0.0, %v602
          %v607 = vsub.f32 0.0, %v603
          %v608 = vsub.f32 0.0, %v604
          %v609 = vsub.f32 0.0, %v605
          %v610 = vmul.f32 %v606, 1.442695
          %v611 = vpow.pop %v610
          %v612 = vmul.f32 %v607, 1.442695
          %v613 = vpow.pop %v612
          %v614 = vmul.f32 %v608, 1.442695
          %v615 = vpow.pop %v614
          %v616 = vmul.f32 %v609, 1.442695
          %v617 = vpow.pop %v616
          %v618 = vadd.f32 %v611, 1.0
          %v619 = vadd.f32 %v613, 1.0
          %v620 = vadd.f32 %v615, 1.0
          %v621 = vadd.f32 %v617, 1.0
          %v622 = vrcp.pop %v618
          %v623 = vmul.f32 1.0, %v622
          %v624 = vrcp.pop %v619
          %v625 = vmul.f32 1.0, %v624
          %v626 = vrcp.pop %v620
          %v627 = vmul.f32 1.0, %v626
          %v628 = vrcp.pop %v621
          %v629 = vmul.f32 1.0, %v628
          %v630 = vmul.f32 %v602, %v623
          %v631 = vmul.f32 %v603, %v625
          %v632 = vmul.f32 %v604, %v627
          %v633 = vmul.f32 %v605, %v629
          %634 = vst [vmem:[#allocation2] sm:$0xff] %v630
          %635 = vst [vmem:[#allocation2 + $0x8] sm:$0xff] %v631
          %636 = vst [vmem:[#allocation2 + $0x10] sm:$0xff] %v632
          %637 = vst [vmem:[#allocation2 + $0x18] sm:$0xff] %v633
          %638 = vst [vmem:[#allocation3] sm:$0xff] %v582
          %639 = vst [vmem:[#allocation3 + $0x8] sm:$0xff] %v584
          %640 = vst [vmem:[#allocation3 + $0x10] sm:$0xff] %v586
          %641 = vst [vmem:[#allocation3 + $0x18] sm:$0xff] %v588
        $region64: #{tpu_custom_call.1} parent=51 // pred_fallthru
          _
        %v642 = vld [vmem:[#allocation2] sm:$0xff]
        %v643 = vld [vmem:[#allocation2 + $0x8] sm:$0xff]
        %v644 = vld [vmem:[#allocation2 + $0x10] sm:$0xff]
        %v645 = vld [vmem:[#allocation2 + $0x18] sm:$0xff]
        %p646 = scmp.eq.s32.totalorder %s29, 3
        %s647 = scalar_select %p646, 1.0, 0.0
        %v648 = vld [vmem:[%s332] sm:$0xff]
        %v649 = vld [vmem:[%s332 + $0x8] sm:$0xff]
        %v650 = vld [vmem:[%s332 + $0x10] sm:$0xff]
        %v651 = vld [vmem:[%s332 + $0x18] sm:$0xff]
        %v652 = vld [vmem:[%s332 + $0x20] sm:$0xff]
        %v653 = vld [vmem:[%s332 + $0x28] sm:$0xff]
        %v654 = vld [vmem:[%s332 + $0x30] sm:$0xff]
        %v655 = vld [vmem:[%s332 + $0x38] sm:$0xff]
        %v656 = vld [vmem:[%s332 + $0x40] sm:$0xff]
        %v657 = vld [vmem:[%s332 + $0x48] sm:$0xff]
        %v658 = vld [vmem:[%s332 + $0x50] sm:$0xff]
        %v659 = vld [vmem:[%s332 + $0x58] sm:$0xff]
        %v660 = vld [vmem:[%s332 + $0x60] sm:$0xff]
        %v661 = vld [vmem:[%s332 + $0x68] sm:$0xff]
        %v662 = vld [vmem:[%s332 + $0x70] sm:$0xff]
        %v663 = vld [vmem:[%s332 + $0x78] sm:$0xff]
        %v664 = vld [vmem:[%s332 + $0x80] sm:$0xff]
        %v665 = vld [vmem:[%s332 + $0x88] sm:$0xff]
        %v666 = vld [vmem:[%s332 + $0x90] sm:$0xff]
        %v667 = vld [vmem:[%s332 + $0x98] sm:$0xff]
        %v668 = vld [vmem:[%s332 + $0xa0] sm:$0xff]
        %v669 = vld [vmem:[%s332 + $0xa8] sm:$0xff]
        %v670 = vld [vmem:[%s332 + $0xb0] sm:$0xff]
        %v671 = vld [vmem:[%s332 + $0xb8] sm:$0xff]
        %v672 = vld [vmem:[%s332 + $0xc0] sm:$0xff]
        %v673 = vld [vmem:[%s332 + $0xc8] sm:$0xff]
        %v674 = vld [vmem:[%s332 + $0xd0] sm:$0xff]
        %v675 = vld [vmem:[%s332 + $0xd8] sm:$0xff]
        %v676 = vld [vmem:[%s332 + $0xe0] sm:$0xff]
        %v677 = vld [vmem:[%s332 + $0xe8] sm:$0xff]
        %v678 = vld [vmem:[%s332 + $0xf0] sm:$0xff]
        %v679 = vld [vmem:[%s332 + $0xf8] sm:$0xff]
        %v680 = vpack.c.bf16 %v644, %v642
        %v681 = vpack.c.bf16 %v645, %v643
        %v682 = vld [vmem:[%s382] sm:$0x3]
        %v684 = vlaneseq
        %v685 = vshrl.u32 %v684, 7
        %v686 = vsub.s32 0, %v685
        %v687 = vrot.slane %v682, %v686
        %v688 = vlaneseq
        %v689 = vshrl.u32 %v688, 7
        %v690 = vsub.s32 1, %v689
        %v691 = vrot.slane %v682, %v690
        %v726 = vunpack.c.l.b16 %v648
        %v727 = vunpack.c.h.b16 %v648
        %v728 = vunpack.c.l.b16 %v649
        %v729 = vunpack.c.h.b16 %v649
        %v730 = vunpack.c.l.b16 %v650
        %v731 = vunpack.c.h.b16 %v650
        %v732 = vunpack.c.l.b16 %v651
        %v733 = vunpack.c.h.b16 %v651
        %v734 = vunpack.c.l.b16 %v652
        %v735 = vunpack.c.h.b16 %v652
        %v736 = vunpack.c.l.b16 %v653
        %v737 = vunpack.c.h.b16 %v653
        %v738 = vunpack.c.l.b16 %v654
        %v739 = vunpack.c.h.b16 %v654
        %v740 = vunpack.c.l.b16 %v655
        %v741 = vunpack.c.h.b16 %v655
        %v742 = vunpack.c.l.b16 %v656
        %v743 = vunpack.c.h.b16 %v656
        %v744 = vunpack.c.l.b16 %v657
        %v745 = vunpack.c.h.b16 %v657
        %v746 = vunpack.c.l.b16 %v658
        %v747 = vunpack.c.h.b16 %v658
        %v748 = vunpack.c.l.b16 %v659
        %v749 = vunpack.c.h.b16 %v659
        %v750 = vunpack.c.l.b16 %v660
        %v751 = vunpack.c.h.b16 %v660
        %v752 = vunpack.c.l.b16 %v661
        %v753 = vunpack.c.h.b16 %v661
        %v754 = vunpack.c.l.b16 %v662
        %v755 = vunpack.c.h.b16 %v662
        %v756 = vunpack.c.l.b16 %v663
        %v757 = vunpack.c.h.b16 %v663
        %v758 = vunpack.c.l.b16 %v664
        %v759 = vunpack.c.h.b16 %v664
        %v760 = vunpack.c.l.b16 %v665
        %v761 = vunpack.c.h.b16 %v665
        %v762 = vunpack.c.l.b16 %v666
        %v763 = vunpack.c.h.b16 %v666
        %v764 = vunpack.c.l.b16 %v667
        %v765 = vunpack.c.h.b16 %v667
        %v766 = vunpack.c.l.b16 %v668
        %v767 = vunpack.c.h.b16 %v668
        %v768 = vunpack.c.l.b16 %v669
        %v769 = vunpack.c.h.b16 %v669
        %v770 = vunpack.c.l.b16 %v670
        %v771 = vunpack.c.h.b16 %v670
        %v772 = vunpack.c.l.b16 %v671
        %v773 = vunpack.c.h.b16 %v671
        %v774 = vunpack.c.l.b16 %v672
        %v775 = vunpack.c.h.b16 %v672
        %v776 = vunpack.c.l.b16 %v673
        %v777 = vunpack.c.h.b16 %v673
        %v778 = vunpack.c.l.b16 %v674
        %v779 = vunpack.c.h.b16 %v674
        %v780 = vunpack.c.l.b16 %v675
        %v781 = vunpack.c.h.b16 %v675
        %v782 = vunpack.c.l.b16 %v676
        %v783 = vunpack.c.h.b16 %v676
        %v784 = vunpack.c.l.b16 %v677
        %v785 = vunpack.c.h.b16 %v677
        %v786 = vunpack.c.l.b16 %v678
        %v787 = vunpack.c.h.b16 %v678
        %v788 = vunpack.c.l.b16 %v679
        %v789 = vunpack.c.h.b16 %v679
        %v790 = vpack.c.b16 %v728, %v726
        %v791 = vpack.c.b16 %v729, %v727
        %v792 = vpack.c.b16 %v732, %v730
        %v793 = vpack.c.b16 %v733, %v731
        %v794 = vpack.c.b16 %v736, %v734
        %v795 = vpack.c.b16 %v737, %v735
        %v796 = vpack.c.b16 %v740, %v738
        %v797 = vpack.c.b16 %v741, %v739
        %v798 = vpack.c.b16 %v744, %v742
        %v799 = vpack.c.b16 %v745, %v743
        %v800 = vpack.c.b16 %v748, %v746
        %v801 = vpack.c.b16 %v749, %v747
        %v802 = vpack.c.b16 %v752, %v750
        %v803 = vpack.c.b16 %v753, %v751
        %v804 = vpack.c.b16 %v756, %v754
        %v805 = vpack.c.b16 %v757, %v755
        %v806 = vpack.c.b16 %v760, %v758
        %v807 = vpack.c.b16 %v761, %v759
        %v808 = vpack.c.b16 %v764, %v762
        %v809 = vpack.c.b16 %v765, %v763
        %v810 = vpack.c.b16 %v768, %v766
        %v811 = vpack.c.b16 %v769, %v767
        %v812 = vpack.c.b16 %v772, %v770
        %v813 = vpack.c.b16 %v773, %v771
        %v814 = vpack.c.b16 %v776, %v774
        %v815 = vpack.c.b16 %v777, %v775
        %v816 = vpack.c.b16 %v780, %v778
        %v817 = vpack.c.b16 %v781, %v779
        %v818 = vpack.c.b16 %v784, %v782
        %v819 = vpack.c.b16 %v785, %v783
        %v820 = vpack.c.b16 %v788, %v786
        %v821 = vpack.c.b16 %v789, %v787
        %854 = vmatprep.subr.bf16.mxu0 %v791
        %855 = vmatpush1.bf16.msra.mxu0 %v790
        %856 = vmatprep.subr.bf16.mxu0 %v793
        %857 = vmatpush1.bf16.msra.mxu0 %v792
        %858 = vmatprep.subr.bf16.mxu0 %v795
        %859 = vmatpush1.bf16.msra.mxu0 %v794
        %860 = vmatprep.subr.bf16.mxu0 %v797
        %861 = vmatpush1.bf16.msra.mxu0 %v796
        %862 = vmatprep.subr.bf16.mxu0 %v799
        %863 = vmatpush1.bf16.msra.mxu0 %v798
        %864 = vmatprep.subr.bf16.mxu0 %v801
        %865 = vmatpush1.bf16.msra.mxu0 %v800
        %866 = vmatprep.subr.bf16.mxu0 %v803
        %867 = vmatpush1.bf16.msra.mxu0 %v802
        %868 = vmatprep.subr.bf16.mxu0 %v805
        %869 = vmatpush1.bf16.msra.mxu0 %v804
        %870 = vmatprep.subr.bf16.mxu0 %v807
        %871 = vmatpush1.bf16.msra.mxu0 %v806
        %872 = vmatprep.subr.bf16.mxu0 %v809
        %873 = vmatpush1.bf16.msra.mxu0 %v808
        %874 = vmatprep.subr.bf16.mxu0 %v811
        %875 = vmatpush1.bf16.msra.mxu0 %v810
        %876 = vmatprep.subr.bf16.mxu0 %v813
        %877 = vmatpush1.bf16.msra.mxu0 %v812
        %878 = vmatprep.subr.bf16.mxu0 %v815
        %879 = vmatpush1.bf16.msra.mxu0 %v814
        %880 = vmatprep.subr.bf16.mxu0 %v817
        %881 = vmatpush1.bf16.msra.mxu0 %v816
        %882 = vmatprep.subr.bf16.mxu0 %v819
        %883 = vmatpush1.bf16.msra.mxu0 %v818
        %884 = vmatprep.subr.bf16.mxu0 %v821
        %885 = vmatpush1.bf16.msra.mxu0 %v820
        %886 = vmatprep.mubr.bf16.mxu0 %v681
        %887 = vmatmul.mubr.bf16.gmra.mrb[0].mxu0 %v680
        %v888 = vpop.f32.mrb[0].mxu0
        %v889 = vadd.f32 %v687, %v888
        %v890 = vpop.f32.mrb[0].mxu0
        %v891 = vadd.f32 %v691, %v890
        %v892 = vpop.f32.mrb[0].mxu0
        %v893 = vadd.f32 %v687, %v892
        %v894 = vpop.f32.mrb[0].mxu0
        %v895 = vadd.f32 %v691, %v894
        %896 = vdwg.mxu0
        %v897 = vld [vmem:[#allocation3] sm:$0xff]
        %v898 = vld [vmem:[#allocation3 + $0x8] sm:$0xff]
        %v899 = vld [vmem:[#allocation3 + $0x10] sm:$0xff]
        %v900 = vld [vmem:[#allocation3 + $0x18] sm:$0xff]
        %v901 = vstv %s647
        %v902 = vmul.f32 %v901, %v897
        %v903 = vmul.f32 %v901, %v898
        %v904 = vmul.f32 %v901, %v899
        %v905 = vmul.f32 %v901, %v900
        %v906 = vadd.f32 %v889, %v902
        %v907 = vadd.f32 %v891, %v903
        %v908 = vadd.f32 %v893, %v904
        %v909 = vadd.f32 %v895, %v905
        %p910 = scmp.ne.s32.totalorder %s29, 7
        // Predicated region
        $region65: #{tpu_custom_call.1} parent=51 // pred_check
          %p911 = pneg %p910
        $region66: #{tpu_custom_call.1} parent=51 // pred_check_branch
          %913 = sbr.rel (%p911) target = $region68
        $region67: #{tpu_custom_call.1} parent=51 // pred_region
          %v914 = vsub.f32 0.0, %v906
          %v915 = vsub.f32 0.0, %v907
          %v916 = vsub.f32 0.0, %v908
          %v917 = vsub.f32 0.0, %v909
          %v918 = vmul.f32 %v914, 1.442695
          %v919 = vpow.pop %v918
          %v920 = vmul.f32 %v915, 1.442695
          %v921 = vpow.pop %v920
          %v922 = vmul.f32 %v916, 1.442695
          %v923 = vpow.pop %v922
          %v924 = vmul.f32 %v917, 1.442695
          %v925 = vpow.pop %v924
          %v926 = vadd.f32 %v919, 1.0
          %v927 = vadd.f32 %v921, 1.0
          %v928 = vadd.f32 %v923, 1.0
          %v929 = vadd.f32 %v925, 1.0
          %v930 = vrcp.pop %v926
          %v931 = vmul.f32 1.0, %v930
          %v932 = vrcp.pop %v927
          %v933 = vmul.f32 1.0, %v932
          %v934 = vrcp.pop %v928
          %v935 = vmul.f32 1.0, %v934
          %v936 = vrcp.pop %v929
          %v937 = vmul.f32 1.0, %v936
          %v938 = vmul.f32 %v906, %v931
          %v939 = vmul.f32 %v907, %v933
          %v940 = vmul.f32 %v908, %v935
          %v941 = vmul.f32 %v909, %v937
          %942 = vst [vmem:[#allocation2] sm:$0xff] %v938
          %943 = vst [vmem:[#allocation2 + $0x8] sm:$0xff] %v939
          %944 = vst [vmem:[#allocation2 + $0x10] sm:$0xff] %v940
          %945 = vst [vmem:[#allocation2 + $0x18] sm:$0xff] %v941
        $region68: #{tpu_custom_call.1} parent=51 // pred_fallthru
          _
        %p946 = scmp.eq.s32.totalorder %s29, 7
        // Predicated region
        $region69: #{tpu_custom_call.1} parent=51 // pred_check
          %p947 = pneg %p946
        $region70: #{tpu_custom_call.1} parent=51 // pred_check_branch
          %949 = sbr.rel (%p947) target = $region72
        $region71: #{tpu_custom_call.1} parent=51 // pred_region
          %v950 = vld [vmem:[%s5] sm:$0xf]
          %v951 = vld [vmem:[%s5 + $0x4] sm:$0xf]
          %v952 = vld [vmem:[%s5 + $0x8] sm:$0xf]
          %v953 = vld [vmem:[%s5 + $0xc] sm:$0xf]
          %v954 = vld [vmem:[%s5 + $0x10] sm:$0xf]
          %v955 = vld [vmem:[%s5 + $0x14] sm:$0xf]
          %v956 = vld [vmem:[%s5 + $0x18] sm:$0xf]
          %v957 = vld [vmem:[%s5 + $0x1c] sm:$0xf]
          %v958 = vld [vmem:[%s5 + $0x20] sm:$0xf]
          %v959 = vld [vmem:[%s5 + $0x24] sm:$0xf]
          %v960 = vld [vmem:[%s5 + $0x28] sm:$0xf]
          %v961 = vld [vmem:[%s5 + $0x2c] sm:$0xf]
          %v962 = vld [vmem:[%s5 + $0x30] sm:$0xf]
          %v963 = vld [vmem:[%s5 + $0x34] sm:$0xf]
          %v964 = vld [vmem:[%s5 + $0x38] sm:$0xf]
          %v965 = vld [vmem:[%s5 + $0x3c] sm:$0xf]
          %v966 = vld [vmem:[%s5 + $0x40] sm:$0xf]
          %v967 = vld [vmem:[%s5 + $0x44] sm:$0xf]
          %v968 = vld [vmem:[%s5 + $0x48] sm:$0xf]
          %v969 = vld [vmem:[%s5 + $0x4c] sm:$0xf]
          %v970 = vld [vmem:[%s5 + $0x50] sm:$0xf]
          %v971 = vld [vmem:[%s5 + $0x54] sm:$0xf]
          %v972 = vld [vmem:[%s5 + $0x58] sm:$0xf]
          %v973 = vld [vmem:[%s5 + $0x5c] sm:$0xf]
          %v974 = vld [vmem:[%s5 + $0x60] sm:$0xf]
          %v975 = vld [vmem:[%s5 + $0x64] sm:$0xf]
          %v976 = vld [vmem:[%s5 + $0x68] sm:$0xf]
          %v977 = vld [vmem:[%s5 + $0x6c] sm:$0xf]
          %v978 = vld [vmem:[%s5 + $0x70] sm:$0xf]
          %v979 = vld [vmem:[%s5 + $0x74] sm:$0xf]
          %v980 = vld [vmem:[%s5 + $0x78] sm:$0xf]
          %v981 = vld [vmem:[%s5 + $0x7c] sm:$0xf]
          %v982 = vld [vmem:[%s7 + $0x2] ss:$0 sm:$0xff]
          %v1015 = vunpack.c.l.b16 %v950
          %v1016 = vunpack.c.l.b16 %v951
          %v1017 = vunpack.c.l.b16 %v952
          %v1018 = vunpack.c.l.b16 %v953
          %v1019 = vunpack.c.l.b16 %v954
          %v1020 = vunpack.c.l.b16 %v955
          %v1021 = vunpack.c.l.b16 %v956
          %v1022 = vunpack.c.l.b16 %v957
          %v1023 = vunpack.c.l.b16 %v958
          %v1024 = vunpack.c.l.b16 %v959
          %v1025 = vunpack.c.l.b16 %v960
          %v1026 = vunpack.c.l.b16 %v961
          %v1027 = vunpack.c.l.b16 %v962
          %v1028 = vunpack.c.l.b16 %v963
          %v1029 = vunpack.c.l.b16 %v964
          %v1030 = vunpack.c.l.b16 %v965
          %v1031 = vunpack.c.l.b16 %v966
          %v1032 = vunpack.c.l.b16 %v967
          %v1033 = vunpack.c.l.b16 %v968
          %v1034 = vunpack.c.l.b16 %v969
          %v1035 = vunpack.c.l.b16 %v970
          %v1036 = vunpack.c.l.b16 %v971
          %v1037 = vunpack.c.l.b16 %v972
          %v1038 = vunpack.c.l.b16 %v973
          %v1039 = vunpack.c.l.b16 %v974
          %v1040 = vunpack.c.l.b16 %v975
          %v1041 = vunpack.c.l.b16 %v976
          %v1042 = vunpack.c.l.b16 %v977
          %v1043 = vunpack.c.l.b16 %v978
          %v1044 = vunpack.c.l.b16 %v979
          %v1045 = vunpack.c.l.b16 %v980
          %v1046 = vunpack.c.l.b16 %v981
          %v1047 = vpack.c.b16 %v1016, %v1015
          %v1048 = vpack.c.b16 %v1018, %v1017
          %v1049 = vpack.c.b16 %v1020, %v1019
          %v1050 = vpack.c.b16 %v1022, %v1021
          %v1051 = vpack.c.b16 %v1024, %v1023
          %v1052 = vpack.c.b16 %v1026, %v1025
          %v1053 = vpack.c.b16 %v1028, %v1027
          %v1054 = vpack.c.b16 %v1030, %v1029
          %v1055 = vpack.c.b16 %v1032, %v1031
          %v1056 = vpack.c.b16 %v1034, %v1033
          %v1057 = vpack.c.b16 %v1036, %v1035
          %v1058 = vpack.c.b16 %v1038, %v1037
          %v1059 = vpack.c.b16 %v1040, %v1039
          %v1060 = vpack.c.b16 %v1042, %v1041
          %v1061 = vpack.c.b16 %v1044, %v1043
          %v1062 = vpack.c.b16 %v1046, %v1045
          %1079 = vmatprep.subr.bf16.mxu0 0
          %1080 = vmatpush1.bf16.msra.mxu0 %v1047
          %1081 = vmatprep.subr.bf16.mxu0 0
          %1082 = vmatpush1.bf16.msra.mxu0 %v1048
          %1083 = vmatprep.subr.bf16.mxu0 0
          %1084 = vmatpush1.bf16.msra.mxu0 %v1049
          %1085 = vmatprep.subr.bf16.mxu0 0
          %1086 = vmatpush1.bf16.msra.mxu0 %v1050
          %1087 = vmatprep.subr.bf16.mxu0 0
          %1088 = vmatpush1.bf16.msra.mxu0 %v1051
          %1089 = vmatprep.subr.bf16.mxu0 0
          %1090 = vmatpush1.bf16.msra.mxu0 %v1052
          %1091 = vmatprep.subr.bf16.mxu0 0
          %1092 = vmatpush1.bf16.msra.mxu0 %v1053
          %1093 = vmatprep.subr.bf16.mxu0 0
          %1094 = vmatpush1.bf16.msra.mxu0 %v1054
          %1095 = vmatprep.subr.bf16.mxu0 0
          %1096 = vmatpush1.bf16.msra.mxu0 %v1055
          %1097 = vmatprep.subr.bf16.mxu0 0
          %1098 = vmatpush1.bf16.msra.mxu0 %v1056
          %1099 = vmatprep.subr.bf16.mxu0 0
          %1100 = vmatpush1.bf16.msra.mxu0 %v1057
          %1101 = vmatprep.subr.bf16.mxu0 0
          %1102 = vmatpush1.bf16.msra.mxu0 %v1058
          %1103 = vmatprep.subr.bf16.mxu0 0
          %1104 = vmatpush1.bf16.msra.mxu0 %v1059
          %1105 = vmatprep.subr.bf16.mxu0 0
          %1106 = vmatpush1.bf16.msra.mxu0 %v1060
          %1107 = vmatprep.subr.bf16.mxu0 0
          %1108 = vmatpush1.bf16.msra.mxu0 %v1061
          %1109 = vmatprep.subr.bf16.mxu0 0
          %1110 = vmatpush1.bf16.msra.mxu0 %v1062
          %1111 = vmatprep.mubr.bf16.mxu0 %v681
          %1112 = vmatmul.mubr.bf16.gmra.mrb[0].mxu0 %v680
          %v1113 = vpop.f32.mrb[0].mxu0
          %v1114 = vadd.f32 %v982, %v1113
          %v1115 = vpop.f32.mrb[0].mxu0
          %v1116 = vpop.f32.mrb[0].mxu0
          %v1117 = vadd.f32 %v982, %v1116
          %v1118 = vpop.f32.mrb[0].mxu0
          %1119 = vdwg.mxu0
          %v1120 = vld [vmem:[#allocation7] sm:$0xf]
          %v1121 = vld [vmem:[#allocation7 + $0x4] sm:$0xf]
          %v1122 = vld [vmem:[#allocation7 + $0x8] sm:$0xf]
          %v1123 = vld [vmem:[#allocation7 + $0xc] sm:$0xf]
          %v1124 = vld [vmem:[#allocation7 + $0x10] sm:$0xf]
          %v1125 = vld [vmem:[#allocation7 + $0x14] sm:$0xf]
          %v1126 = vld [vmem:[#allocation7 + $0x18] sm:$0xf]
          %v1127 = vld [vmem:[#allocation7 + $0x1c] sm:$0xf]
          %v1128 = vld [vmem:[#allocation7 + $0x20] sm:$0xf]
          %v1129 = vld [vmem:[#allocation7 + $0x24] sm:$0xf]
          %v1130 = vld [vmem:[#allocation7 + $0x28] sm:$0xf]
          %v1131 = vld [vmem:[#allocation7 + $0x2c] sm:$0xf]
          %v1132 = vld [vmem:[#allocation7 + $0x30] sm:$0xf]
          %v1133 = vld [vmem:[#allocation7 + $0x34] sm:$0xf]
          %v1134 = vld [vmem:[#allocation7 + $0x38] sm:$0xf]
          %v1135 = vld [vmem:[#allocation7 + $0x3c] sm:$0xf]
          %v1136 = vld [vmem:[#allocation7 + $0x40] sm:$0xf]
          %v1137 = vld [vmem:[#allocation7 + $0x44] sm:$0xf]
          %v1138 = vld [vmem:[#allocation7 + $0x48] sm:$0xf]
          %v1139 = vld [vmem:[#allocation7 + $0x4c] sm:$0xf]
          %v1140 = vld [vmem:[#allocation7 + $0x50] sm:$0xf]
          %v1141 = vld [vmem:[#allocation7 + $0x54] sm:$0xf]
          %v1142 = vld [vmem:[#allocation7 + $0x58] sm:$0xf]
          %v1143 = vld [vmem:[#allocation7 + $0x5c] sm:$0xf]
          %v1144 = vld [vmem:[#allocation7 + $0x60] sm:$0xf]
          %v1145 = vld [vmem:[#allocation7 + $0x64] sm:$0xf]
          %v1146 = vld [vmem:[#allocation7 + $0x68] sm:$0xf]
          %v1147 = vld [vmem:[#allocation7 + $0x6c] sm:$0xf]
          %v1148 = vld [vmem:[#allocation7 + $0x70] sm:$0xf]
          %v1149 = vld [vmem:[#allocation7 + $0x74] sm:$0xf]
          %v1150 = vld [vmem:[#allocation7 + $0x78] sm:$0xf]
          %v1151 = vld [vmem:[#allocation7 + $0x7c] sm:$0xf]
          %v1152 = vpack.c.bf16 %v908, %v906
          %v1153 = vpack.c.bf16 %v909, %v907
          %v1154 = vld [vmem:[%s7 + $0x1] ss:$0 sm:$0xff]
          %v1187 = vunpack.c.l.b16 %v1120
          %v1188 = vunpack.c.l.b16 %v1121
          %v1189 = vunpack.c.l.b16 %v1122
          %v1190 = vunpack.c.l.b16 %v1123
          %v1191 = vunpack.c.l.b16 %v1124
          %v1192 = vunpack.c.l.b16 %v1125
          %v1193 = vunpack.c.l.b16 %v1126
          %v1194 = vunpack.c.l.b16 %v1127
          %v1195 = vunpack.c.l.b16 %v1128
          %v1196 = vunpack.c.l.b16 %v1129
          %v1197 = vunpack.c.l.b16 %v1130
          %v1198 = vunpack.c.l.b16 %v1131
          %v1199 = vunpack.c.l.b16 %v1132
          %v1200 = vunpack.c.l.b16 %v1133
          %v1201 = vunpack.c.l.b16 %v1134
          %v1202 = vunpack.c.l.b16 %v1135
          %v1203 = vunpack.c.l.b16 %v1136
          %v1204 = vunpack.c.l.b16 %v1137
          %v1205 = vunpack.c.l.b16 %v1138
          %v1206 = vunpack.c.l.b16 %v1139
          %v1207 = vunpack.c.l.b16 %v1140
          %v1208 = vunpack.c.l.b16 %v1141
          %v1209 = vunpack.c.l.b16 %v1142
          %v1210 = vunpack.c.l.b16 %v1143
          %v1211 = vunpack.c.l.b16 %v1144
          %v1212 = vunpack.c.l.b16 %v1145
          %v1213 = vunpack.c.l.b16 %v1146
          %v1214 = vunpack.c.l.b16 %v1147
          %v1215 = vunpack.c.l.b16 %v1148
          %v1216 = vunpack.c.l.b16 %v1149
          %v1217 = vunpack.c.l.b16 %v1150
          %v1218 = vunpack.c.l.b16 %v1151
          %v1219 = vpack.c.b16 %v1188, %v1187
          %v1220 = vpack.c.b16 %v1190, %v1189
          %v1221 = vpack.c.b16 %v1192, %v1191
          %v1222 = vpack.c.b16 %v1194, %v1193
          %v1223 = vpack.c.b16 %v1196, %v1195
          %v1224 = vpack.c.b16 %v1198, %v1197
          %v1225 = vpack.c.b16 %v1200, %v1199
          %v1226 = vpack.c.b16 %v1202, %v1201
          %v1227 = vpack.c.b16 %v1204, %v1203
          %v1228 = vpack.c.b16 %v1206, %v1205
          %v1229 = vpack.c.b16 %v1208, %v1207
          %v1230 = vpack.c.b16 %v1210, %v1209
          %v1231 = vpack.c.b16 %v1212, %v1211
          %v1232 = vpack.c.b16 %v1214, %v1213
          %v1233 = vpack.c.b16 %v1216, %v1215
          %v1234 = vpack.c.b16 %v1218, %v1217
          %1251 = vmatprep.subr.bf16.mxu0 0
          %1252 = vmatpush1.bf16.msra.mxu0 %v1219
          %1253 = vmatprep.subr.bf16.mxu0 0
          %1254 = vmatpush1.bf16.msra.mxu0 %v1220
          %1255 = vmatprep.subr.bf16.mxu0 0
          %1256 = vmatpush1.bf16.msra.mxu0 %v1221
          %1257 = vmatprep.subr.bf16.mxu0 0
          %1258 = vmatpush1.bf16.msra.mxu0 %v1222
          %1259 = vmatprep.subr.bf16.mxu0 0
          %1260 = vmatpush1.bf16.msra.mxu0 %v1223
          %1261 = vmatprep.subr.bf16.mxu0 0
          %1262 = vmatpush1.bf16.msra.mxu0 %v1224
          %1263 = vmatprep.subr.bf16.mxu0 0
          %1264 = vmatpush1.bf16.msra.mxu0 %v1225
          %1265 = vmatprep.subr.bf16.mxu0 0
          %1266 = vmatpush1.bf16.msra.mxu0 %v1226
          %1267 = vmatprep.subr.bf16.mxu0 0
          %1268 = vmatpush1.bf16.msra.mxu0 %v1227
          %1269 = vmatprep.subr.bf16.mxu0 0
          %1270 = vmatpush1.bf16.msra.mxu0 %v1228
          %1271 = vmatprep.subr.bf16.mxu0 0
          %1272 = vmatpush1.bf16.msra.mxu0 %v1229
          %1273 = vmatprep.subr.bf16.mxu0 0
          %1274 = vmatpush1.bf16.msra.mxu0 %v1230
          %1275 = vmatprep.subr.bf16.mxu0 0
          %1276 = vmatpush1.bf16.msra.mxu0 %v1231
          %1277 = vmatprep.subr.bf16.mxu0 0
          %1278 = vmatpush1.bf16.msra.mxu0 %v1232
          %1279 = vmatprep.subr.bf16.mxu0 0
          %1280 = vmatpush1.bf16.msra.mxu0 %v1233
          %1281 = vmatprep.subr.bf16.mxu0 0
          %1282 = vmatpush1.bf16.msra.mxu0 %v1234
          %1283 = vmatprep.mubr.bf16.mxu0 %v1153
          %1284 = vmatmul.mubr.bf16.gmra.mrb[0].mxu0 %v1152
          %v1285 = vpop.f32.mrb[0].mxu0
          %v1286 = vadd.f32 %v1154, %v1285
          %v1287 = vpop.f32.mrb[0].mxu0
          %v1288 = vpop.f32.mrb[0].mxu0
          %v1289 = vadd.f32 %v1154, %v1288
          %v1290 = vpop.f32.mrb[0].mxu0
          %1291 = vdwg.mxu0
          %v1292 = vsub.f32 0.0, %v1286
          %v1293 = vsub.f32 0.0, %v1289
          %v1294 = vmul.f32 %v1292, 1.442695
          %v1295 = vpow.pop %v1294
          %v1296 = vmul.f32 %v1293, 1.442695
          %v1297 = vpow.pop %v1296
          %v1298 = vadd.f32 %v1295, 1.0
          %v1299 = vadd.f32 %v1297, 1.0
          %v1300 = vrcp.pop %v1298
          %v1301 = vmul.f32 1.0, %v1300
          %v1302 = vrcp.pop %v1299
          %v1303 = vmul.f32 1.0, %v1302
          %v1304 = vmul.f32 %v1286, %v1301
          %v1305 = vmul.f32 %v1289, %v1303
          %v1306 = vld [vmem:[%s6] sm:$0xf]
          %v1307 = vld [vmem:[%s6 + $0x4] sm:$0xf]
          %v1308 = vld [vmem:[%s6 + $0x8] sm:$0xf]
          %v1309 = vld [vmem:[%s6 + $0xc] sm:$0xf]
          %v1310 = vld [vmem:[%s6 + $0x10] sm:$0xf]
          %v1311 = vld [vmem:[%s6 + $0x14] sm:$0xf]
          %v1312 = vld [vmem:[%s6 + $0x18] sm:$0xf]
          %v1313 = vld [vmem:[%s6 + $0x1c] sm:$0xf]
          %v1314 = vld [vmem:[%s6 + $0x20] sm:$0xf]
          %v1315 = vld [vmem:[%s6 + $0x24] sm:$0xf]
          %v1316 = vld [vmem:[%s6 + $0x28] sm:$0xf]
          %v1317 = vld [vmem:[%s6 + $0x2c] sm:$0xf]
          %v1318 = vld [vmem:[%s6 + $0x30] sm:$0xf]
          %v1319 = vld [vmem:[%s6 + $0x34] sm:$0xf]
          %v1320 = vld [vmem:[%s6 + $0x38] sm:$0xf]
          %v1321 = vld [vmem:[%s6 + $0x3c] sm:$0xf]
          %v1322 = vpack.c.bf16 %v1305, %v1304
          %v1323 = vld [vmem:[%s7 + $0x3] ss:$0 sm:$0xff]
          %v1340 = vunpack.c.l.b16 %v1306
          %v1341 = vunpack.c.l.b16 %v1307
          %v1342 = vunpack.c.l.b16 %v1308
          %v1343 = vunpack.c.l.b16 %v1309
          %v1344 = vunpack.c.l.b16 %v1310
          %v1345 = vunpack.c.l.b16 %v1311
          %v1346 = vunpack.c.l.b16 %v1312
          %v1347 = vunpack.c.l.b16 %v1313
          %v1348 = vunpack.c.l.b16 %v1314
          %v1349 = vunpack.c.l.b16 %v1315
          %v1350 = vunpack.c.l.b16 %v1316
          %v1351 = vunpack.c.l.b16 %v1317
          %v1352 = vunpack.c.l.b16 %v1318
          %v1353 = vunpack.c.l.b16 %v1319
          %v1354 = vunpack.c.l.b16 %v1320
          %v1355 = vunpack.c.l.b16 %v1321
          %v1356 = vpack.c.b16 %v1341, %v1340
          %v1357 = vpack.c.b16 %v1343, %v1342
          %v1358 = vpack.c.b16 %v1345, %v1344
          %v1359 = vpack.c.b16 %v1347, %v1346
          %v1360 = vpack.c.b16 %v1349, %v1348
          %v1361 = vpack.c.b16 %v1351, %v1350
          %v1362 = vpack.c.b16 %v1353, %v1352
          %v1363 = vpack.c.b16 %v1355, %v1354
          %1372 = vmatprep.subr.bf16.mxu0 0
          %1373 = vmatpush1.bf16.msra.mxu0 %v1356
          %1374 = vmatprep.subr.bf16.mxu0 0
          %1375 = vmatpush1.bf16.msra.mxu0 %v1357
          %1376 = vmatprep.subr.bf16.mxu0 0
          %1377 = vmatpush1.bf16.msra.mxu0 %v1358
          %1378 = vmatprep.subr.bf16.mxu0 0
          %1379 = vmatpush1.bf16.msra.mxu0 %v1359
          %1380 = vmatprep.subr.bf16.mxu0 0
          %1381 = vmatpush1.bf16.msra.mxu0 %v1360
          %1382 = vmatprep.subr.bf16.mxu0 0
          %1383 = vmatpush1.bf16.msra.mxu0 %v1361
          %1384 = vmatprep.subr.bf16.mxu0 0
          %1385 = vmatpush1.bf16.msra.mxu0 %v1362
          %1386 = vmatprep.subr.bf16.mxu0 0
          %1387 = vmatpush1.bf16.msra.mxu0 %v1363
          %1388 = vmatprep.subr.bf16.mxu0 0
          %1389 = vmatpush1.bf16.msra.mxu0 0
          %1390 = vmatprep.subr.bf16.mxu0 0
          %1391 = vmatpush1.bf16.msra.mxu0 0
          %1392 = vmatprep.subr.bf16.mxu0 0
          %1393 = vmatpush1.bf16.msra.mxu0 0
          %1394 = vmatprep.subr.bf16.mxu0 0
          %1395 = vmatpush1.bf16.msra.mxu0 0
          %1396 = vmatprep.subr.bf16.mxu0 0
          %1397 = vmatpush1.bf16.msra.mxu0 0
          %1398 = vmatprep.subr.bf16.mxu0 0
          %1399 = vmatpush1.bf16.msra.mxu0 0
          %1400 = vmatprep.subr.bf16.mxu0 0
          %1401 = vmatpush1.bf16.msra.mxu0 0
          %1402 = vmatprep.subr.bf16.mxu0 0
          %1403 = vmatpush1.bf16.msra.mxu0 0
          %1404 = vmatprep.mubr.bf16.mxu0 0
          %1405 = vmatmul.mubr.bf16.gmra.mrb[0].mxu0 %v1322
          %v1406 = vpop.f32.mrb[0].mxu0
          %v1407 = vadd.f32 %v1323, %v1406
          %v1408 = vpop.f32.mrb[0].mxu0
          %v1409 = vpop.f32.mrb[0].mxu0
          %v1410 = vadd.f32 %v1323, %v1409
          %v1411 = vpop.f32.mrb[0].mxu0
          %1412 = vdwg.mxu0
          %v1413 = vsub.f32 0.0, %v1407
          %v1414 = vsub.f32 0.0, %v1410
          %v1415 = vmul.f32 %v1413, 1.442695
          %v1416 = vpow.pop %v1415
          %v1417 = vmul.f32 %v1414, 1.442695
          %v1418 = vpow.pop %v1417
          %v1419 = vadd.f32 %v1416, 1.0
          %v1420 = vadd.f32 %v1418, 1.0
          %v1421 = vrcp.pop %v1419
          %v1422 = vmul.f32 1.0, %v1421
          %v1423 = vrcp.pop %v1420
          %v1424 = vmul.f32 1.0, %v1423
          %v1425 = vmul.f32 %v1422, 0.1
          %v1426 = vmul.f32 %v1424, 0.1
          %v1427 = vmul.f32 %v1422, %v1422
          %v1428 = vmul.f32 %v1424, %v1424
          %1431 = vrot.lane.b32.xlu0 %v1427, 127
          %v1432 = vpop.permute.xlu0 %1431
          %1433 = vrot.lane.b32.xlu0 %v1428, 127
          %v1434 = vpop.permute.xlu0 %1433
          %v1437 = vadd.f32 %v1427, %v1432
          %v1438 = vadd.f32 %v1428, %v1434
          %1439 = vrot.lane.b32.xlu0 %v1427, 126
          %v1440 = vpop.permute.xlu0 %1439
          %1441 = vrot.lane.b32.xlu0 %v1428, 126
          %v1442 = vpop.permute.xlu0 %1441
          %v1445 = vadd.f32 %v1437, %v1440
          %v1446 = vadd.f32 %v1438, %v1442
          %v1447 = vmul.f32 %v1114, %v1114
          %v1448 = vmul.f32 %v1117, %v1117
          %1451 = vrot.lane.b32.xlu0 %v1447, 3
          %v1452 = vpop.permute.xlu0 %1451
          %1453 = vrot.lane.b32.xlu0 %v1448, 3
          %v1454 = vpop.permute.xlu0 %1453
          %v1457 = vadd.f32 %v1445, %v1452
          %v1458 = vadd.f32 %v1446, %v1454
          %v1459 = vrsqrt.pop %v1457
          %v1460 = vmul.f32 %v1457, %v1459
          %vm1461 = vcmp.eq.f32.partialorder %v1457, inf
          %v1462 = vsel %vm1461, %v1457, %v1460
          %vm1463 = vcmp.eq.f32.partialorder %v1457, 0.0
          %v1464 = vand.u32 %v1457, 2147483648
          %v1465 = vsel %vm1463, %v1464, %v1462
          %v1466 = vrsqrt.pop %v1458
          %v1467 = vmul.f32 %v1458, %v1466
          %vm1468 = vcmp.eq.f32.partialorder %v1458, inf
          %v1469 = vsel %vm1468, %v1458, %v1467
          %vm1470 = vcmp.eq.f32.partialorder %v1458, 0.0
          %v1471 = vand.u32 %v1458, 2147483648
          %v1472 = vsel %vm1470, %v1471, %v1469
          %v1473 = vmax.f32 %v1465, 1e-12
          %v1474 = vmax.f32 %v1472, 1e-12
          %v1475 = vrcp.pop %v1473
          %v1476 = vrcp.pop %v1474
          %v1477 = vmul.f32 %v1422, %v1475
          %v1478 = vmul.f32 %v1424, %v1476
          %1481 = vrot.lane.b32.xlu0 %v1475, 1
          %v1482 = vpop.permute.xlu0 %1481
          %1483 = vrot.lane.b32.xlu0 %v1476, 1
          %v1484 = vpop.permute.xlu0 %1483
          %v1487 = vmul.f32 %v1422, %v1482
          %v1488 = vmul.f32 %v1424, %v1484
          %1489 = vrot.lane.b32.xlu0 %v1475, 2
          %v1490 = vpop.permute.xlu0 %1489
          %1491 = vrot.lane.b32.xlu0 %v1476, 2
          %v1492 = vpop.permute.xlu0 %1491
          %v1495 = vmul.f32 %v1422, %v1490
          %v1496 = vmul.f32 %v1424, %v1492
          %1497 = vrot.lane.b32.xlu0 %v1475, 125
          %v1498 = vpop.permute.xlu0 %1497
          %1499 = vrot.lane.b32.xlu0 %v1476, 125
          %v1500 = vpop.permute.xlu0 %1499
          %v1503 = vmul.f32 %v1114, %v1498
          %v1504 = vmul.f32 %v1117, %v1500
          %v1505 = vmul.f32 %v1477, %v1477
          %v1506 = vmul.f32 %v1478, %v1478
          %v1507 = vmul.f32 %v1487, %v1487
          %v1508 = vmul.f32 %v1488, %v1488
          %1511 = vrot.lane.b32.xlu0 %v1507, 127
          %v1512 = vpop.permute.xlu0 %1511
          %1513 = vrot.lane.b32.xlu0 %v1508, 127
          %v1514 = vpop.permute.xlu0 %1513
          %v1517 = vadd.f32 %v1505, %v1512
          %v1518 = vadd.f32 %v1506, %v1514
          %v1519 = vmul.f32 %v1495, %v1495
          %v1520 = vmul.f32 %v1496, %v1496
          %1523 = vrot.lane.b32.xlu0 %v1519, 126
          %v1524 = vpop.permute.xlu0 %1523
          %1525 = vrot.lane.b32.xlu0 %v1520, 126
          %v1526 = vpop.permute.xlu0 %1525
          %v1529 = vadd.f32 %v1517, %v1524
          %v1530 = vadd.f32 %v1518, %v1526
          %v1531 = vmul.f32 %v1503, %v1503
          %v1532 = vmul.f32 %v1504, %v1504
          %1535 = vrot.lane.b32.xlu0 %v1531, 3
          %v1536 = vpop.permute.xlu0 %1535
          %1537 = vrot.lane.b32.xlu0 %v1532, 3
          %v1538 = vpop.permute.xlu0 %1537
          %v1541 = vadd.f32 %v1529, %v1536
          %v1542 = vadd.f32 %v1530, %v1538
          %v1543 = vrcp.pop %v1541
          %v1544 = vmul.f32 2.0, %v1543
          %v1545 = vrcp.pop %v1542
          %v1546 = vmul.f32 2.0, %v1545
          %1547 = vrot.lane.b32.xlu0 %v1531, 5
          %v1548 = vpop.permute.xlu0 %1547
          %1549 = vrot.lane.b32.xlu0 %v1532, 5
          %v1550 = vpop.permute.xlu0 %1549
          %v1553 = vadd.f32 %v1519, %v1548
          %v1554 = vadd.f32 %v1520, %v1550
          %1557 = vrot.lane.b32.xlu0 %v1553, 126
          %v1558 = vpop.permute.xlu0 %1557
          %1559 = vrot.lane.b32.xlu0 %v1554, 126
          %v1560 = vpop.permute.xlu0 %1559
          %v1563 = vmul.f32 %v1544, %v1558
          %v1564 = vmul.f32 %v1546, %v1560
          %v1565 = vsub.f32 1.0, %v1563
          %v1566 = vsub.f32 1.0, %v1564
          %1569 = vrot.lane.b32.xlu0 %v1495, 127
          %v1570 = vpop.permute.xlu0 %1569
          %1571 = vrot.lane.b32.xlu0 %v1496, 127
          %v1572 = vpop.permute.xlu0 %1571
          %v1575 = vmul.f32 %v1487, %v1570
          %v1576 = vmul.f32 %v1488, %v1572
          %1579 = vrot.lane.b32.xlu0 %v1477, 125
          %v1580 = vpop.permute.xlu0 %1579
          %1581 = vrot.lane.b32.xlu0 %v1478, 125
          %v1582 = vpop.permute.xlu0 %1581
          %v1585 = vmul.f32 %v1503, %v1580
          %v1586 = vmul.f32 %v1504, %v1582
          %1589 = vrot.lane.b32.xlu0 %v1585, 4
          %v1590 = vpop.permute.xlu0 %1589
          %1591 = vrot.lane.b32.xlu0 %v1586, 4
          %v1592 = vpop.permute.xlu0 %1591
          %v1595 = vsub.f32 %v1575, %v1590
          %v1596 = vsub.f32 %v1576, %v1592
          %1599 = vrot.lane.b32.xlu0 %v1595, 127
          %v1600 = vpop.permute.xlu0 %1599
          %1601 = vrot.lane.b32.xlu0 %v1596, 127
          %v1602 = vpop.permute.xlu0 %1601
          %v1605 = vmul.f32 %v1544, %v1600
          %v1606 = vmul.f32 %v1546, %v1602
          %1609 = vrot.lane.b32.xlu0 %v1503, 4
          %v1610 = vpop.permute.xlu0 %1609
          %1611 = vrot.lane.b32.xlu0 %v1504, 4
          %v1612 = vpop.permute.xlu0 %1611
          %v1615 = vmul.f32 %v1487, %v1610
          %v1616 = vmul.f32 %v1488, %v1612
          %1617 = vrot.lane.b32.xlu0 %v1477, 2
          %v1618 = vpop.permute.xlu0 %1617
          %1619 = vrot.lane.b32.xlu0 %v1478, 2
          %v1620 = vpop.permute.xlu0 %1619
          %v1623 = vmul.f32 %v1495, %v1618
          %v1624 = vmul.f32 %v1496, %v1620
          %1627 = vrot.lane.b32.xlu0 %v1623, 127
          %v1628 = vpop.permute.xlu0 %1627
          %1629 = vrot.lane.b32.xlu0 %v1624, 127
          %v1630 = vpop.permute.xlu0 %1629
          %v1633 = vadd.f32 %v1615, %v1628
          %v1634 = vadd.f32 %v1616, %v1630
          %1637 = vrot.lane.b32.xlu0 %v1633, 127
          %v1638 = vpop.permute.xlu0 %1637
          %1639 = vrot.lane.b32.xlu0 %v1634, 127
          %v1640 = vpop.permute.xlu0 %1639
          %v1643 = vmul.f32 %v1544, %v1638
          %v1644 = vmul.f32 %v1546, %v1640
          %v1645 = vadd.f32 %v1575, %v1590
          %v1646 = vadd.f32 %v1576, %v1592
          %1649 = vrot.lane.b32.xlu0 %v1645, 127
          %v1650 = vpop.permute.xlu0 %1649
          %1651 = vrot.lane.b32.xlu0 %v1646, 127
          %v1652 = vpop.permute.xlu0 %1651
          %v1655 = vmul.f32 %v1544, %v1650
          %v1656 = vmul.f32 %v1546, %v1652
          %1657 = vrot.lane.b32.xlu0 %v1531, 4
          %v1658 = vpop.permute.xlu0 %1657
          %1659 = vrot.lane.b32.xlu0 %v1532, 4
          %v1660 = vpop.permute.xlu0 %1659
          %v1663 = vadd.f32 %v1507, %v1658
          %v1664 = vadd.f32 %v1508, %v1660
          %1667 = vrot.lane.b32.xlu0 %v1663, 127
          %v1668 = vpop.permute.xlu0 %1667
          %1669 = vrot.lane.b32.xlu0 %v1664, 127
          %v1670 = vpop.permute.xlu0 %1669
          %v1673 = vmul.f32 %v1544, %v1668
          %v1674 = vmul.f32 %v1546, %v1670
          %v1675 = vsub.f32 1.0, %v1673
          %v1676 = vsub.f32 1.0, %v1674
          %1677 = vrot.lane.b32.xlu0 %v1503, 5
          %v1678 = vpop.permute.xlu0 %1677
          %1679 = vrot.lane.b32.xlu0 %v1504, 5
          %v1680 = vpop.permute.xlu0 %1679
          %v1683 = vmul.f32 %v1495, %v1678
          %v1684 = vmul.f32 %v1496, %v1680
          %1685 = vrot.lane.b32.xlu0 %v1477, 1
          %v1686 = vpop.permute.xlu0 %1685
          %1687 = vrot.lane.b32.xlu0 %v1478, 1
          %v1688 = vpop.permute.xlu0 %1687
          %v1691 = vmul.f32 %v1487, %v1686
          %v1692 = vmul.f32 %v1488, %v1688
          %1695 = vrot.lane.b32.xlu0 %v1691, 1
          %v1696 = vpop.permute.xlu0 %1695
          %1697 = vrot.lane.b32.xlu0 %v1692, 1
          %v1698 = vpop.permute.xlu0 %1697
          %v1701 = vsub.f32 %v1683, %v1696
          %v1702 = vsub.f32 %v1684, %v1698
          %1705 = vrot.lane.b32.xlu0 %v1701, 126
          %v1706 = vpop.permute.xlu0 %1705
          %1707 = vrot.lane.b32.xlu0 %v1702, 126
          %v1708 = vpop.permute.xlu0 %1707
          %v1711 = vmul.f32 %v1544, %v1706
          %v1712 = vmul.f32 %v1546, %v1708
          %v1713 = vsub.f32 %v1615, %v1628
          %v1714 = vsub.f32 %v1616, %v1630
          %1717 = vrot.lane.b32.xlu0 %v1713, 127
          %v1718 = vpop.permute.xlu0 %1717
          %1719 = vrot.lane.b32.xlu0 %v1714, 127
          %v1720 = vpop.permute.xlu0 %1719
          %v1723 = vmul.f32 %v1544, %v1718
          %v1724 = vmul.f32 %v1546, %v1720
          %v1725 = vadd.f32 %v1683, %v1696
          %v1726 = vadd.f32 %v1684, %v1698
          %1729 = vrot.lane.b32.xlu0 %v1725, 126
          %v1730 = vpop.permute.xlu0 %1729
          %1731 = vrot.lane.b32.xlu0 %v1726, 126
          %v1732 = vpop.permute.xlu0 %1731
          %v1735 = vmul.f32 %v1544, %v1730
          %v1736 = vmul.f32 %v1546, %v1732
          %1737 = vrot.lane.b32.xlu0 %v1519, 127
          %v1738 = vpop.permute.xlu0 %1737
          %1739 = vrot.lane.b32.xlu0 %v1520, 127
          %v1740 = vpop.permute.xlu0 %1739
          %v1743 = vadd.f32 %v1507, %v1738
          %v1744 = vadd.f32 %v1508, %v1740
          %1747 = vrot.lane.b32.xlu0 %v1743, 127
          %v1748 = vpop.permute.xlu0 %1747
          %1749 = vrot.lane.b32.xlu0 %v1744, 127
          %v1750 = vpop.permute.xlu0 %1749
          %v1753 = vmul.f32 %v1544, %v1748
          %v1754 = vmul.f32 %v1546, %v1750
          %v1755 = vsub.f32 1.0, %v1753
          %v1756 = vsub.f32 1.0, %v1754
          %1759 = vrot.lane.b32.xlu0 %v1565, 125
          %v1760 = vpop.permute.xlu0 %1759
          %1761 = vrot.lane.b32.xlu0 %v1566, 125
          %v1762 = vpop.permute.xlu0 %1761
          %1767 = vrot.lane.b32.xlu0 %v1605, 126
          %v1768 = vpop.permute.xlu0 %1767
          %1769 = vrot.lane.b32.xlu0 %v1606, 126
          %v1770 = vpop.permute.xlu0 %1769
          %1775 = vrot.lane.b32.xlu0 %v1643, 127
          %v1776 = vpop.permute.xlu0 %1775
          %1777 = vrot.lane.b32.xlu0 %v1644, 127
          %v1778 = vpop.permute.xlu0 %1777
          %1783 = vrot.lane.b32.xlu0 %v1675, 1
          %v1784 = vpop.permute.xlu0 %1783
          %1785 = vrot.lane.b32.xlu0 %v1676, 1
          %v1786 = vpop.permute.xlu0 %1785
          %1791 = vrot.lane.b32.xlu0 %v1711, 2
          %v1792 = vpop.permute.xlu0 %1791
          %1793 = vrot.lane.b32.xlu0 %v1712, 2
          %v1794 = vpop.permute.xlu0 %1793
          %1799 = vrot.lane.b32.xlu0 %v1723, 3
          %v1800 = vpop.permute.xlu0 %1799
          %1801 = vrot.lane.b32.xlu0 %v1724, 3
          %v1802 = vpop.permute.xlu0 %1801
          %1807 = vrot.lane.b32.xlu0 %v1735, 4
          %v1808 = vpop.permute.xlu0 %1807
          %1809 = vrot.lane.b32.xlu0 %v1736, 4
          %v1810 = vpop.permute.xlu0 %1809
          %1815 = vrot.lane.b32.xlu0 %v1755, 5
          %v1816 = vpop.permute.xlu0 %1815
          %1817 = vrot.lane.b32.xlu0 %v1756, 5
          %v1818 = vpop.permute.xlu0 %1817
          %1823 = vrot.lane.b32.xlu0 %v1425, 9
          %v1824 = vpop.permute.xlu0 %1823
          %1825 = vrot.lane.b32.xlu0 %v1426, 9
          %v1826 = vpop.permute.xlu0 %1825
          %vm1829 = vcmask 7168
          %v1830 = vsel %vm1829, %v1760, %v1768
          %v1831 = vsel %vm1829, %v1762, %v1770
          %vm1832 = vcmask 15360
          %v1833 = vsel %vm1832, %v1830, %v1776
          %v1834 = vsel %vm1832, %v1831, %v1778
          %vm1835 = vcmask 23552
          %v1836 = vsel %vm1835, %v1833, %v1655
          %v1837 = vsel %vm1835, %v1834, %v1656
          %vm1838 = vcmask 31744
          %v1839 = vsel %vm1838, %v1836, %v1784
          %v1840 = vsel %vm1838, %v1837, %v1786
          %vm1841 = vcmask 39936
          %v1842 = vsel %vm1841, %v1839, %v1792
          %v1843 = vsel %vm1841, %v1840, %v1794
          %vm1844 = vcmask 48128
          %v1845 = vsel %vm1844, %v1842, %v1800
          %v1846 = vsel %vm1844, %v1843, %v1802
          %vm1847 = vcmask 56320
          %v1848 = vsel %vm1847, %v1845, %v1808
          %v1849 = vsel %vm1847, %v1846, %v1810
          %vm1850 = vcmask 64512
          %v1851 = vsel %vm1850, %v1848, %v1816
          %v1852 = vsel %vm1850, %v1849, %v1818
          %vm1853 = vcmask 72704
          %v1854 = vsel %vm1853, %v1851, %v1824
          %v1855 = vsel %vm1853, %v1852, %v1826
          %vm1856 = vcmask 97280
          %1857 = vst.msk [vmem:[#allocation9] sm:$0xff] %vm1856, %v1854
          %1858 = vst.msk [vmem:[#allocation9 + $0x8] sm:$0xff] %vm1856, %v1855
        $region72: #{tpu_custom_call.1} parent=51 // pred_fallthru
          _
        // Predicated region
        $region73: #{tpu_custom_call.1} parent=51 // pred_check
          %p1859 = pneg %p237
        $region74: #{tpu_custom_call.1} parent=51 // pred_check_branch
          %1861 = sbr.rel (%p1859) target = $region76
        $region75: #{tpu_custom_call.1} parent=51 // pred_region
          %s1862 = smul.u32 2, %s28
          %s1864 = ssub.s32 256, 256
          %1865 = vsyncadd [#allocation6], %s1864
          %s1866 = smul.addr %s1862, 128
          %s1867 = scalar_lea.hbm %s8, %s1866
          %s1868 = sshll.u32 [#allocation9], 4
          %s1869 = int_to_ptr.vmem [resolvable:$true] %s1868
          %1874 = dma.vmem_to_hbm [thread:$0]  %s1869, 256, %s1867, [#allocation6], 128, 128, 8
        $region76: #{tpu_custom_call.1} parent=51 // pred_fallthru
          _
        // Predicated region
        $region77: #{tpu_custom_call.1} parent=51 // pred_check
          %p1875 = pneg %p237
        $region78: #{tpu_custom_call.1} parent=51 // pred_check_branch
          %1877 = sbr.rel (%p1875) target = $region80
        $region79: #{tpu_custom_call.1} parent=51 // pred_region
          %1878 = dma.done [#allocation6], 256
        $region80: #{tpu_custom_call.1} parent=51 // pred_fallthru
          _
      $region52: #{tpu_custom_call.1} parent=5 // pred_fallthru
        _
      %p1879 = scmp.le.s32.totalorder 2, %s19
      // Predicated region
      $region81: #{tpu_custom_call.1} parent=5 // pred_check
        %p1880 = pneg %p1879
      $region82: #{tpu_custom_call.1} parent=5 // pred_check_branch
        %1882 = sbr.rel (%p1880) target = $region84
      $region83: #{tpu_custom_call.1} parent=5 // pred_region
        %s1883 = ssub.s32 %s19, 2
      $region84: #{tpu_custom_call.1} parent=5 // pred_fallthru
        _
    $region6: #{tpu_custom_call.1} parent=1 // loop_footer
      %s23 = sadd.s32 1, %s19
    $region7: #{tpu_custom_call.1} parent=1 // loop_footer_branch
      %18 = sbr.rel target = $region3
    $region8: #{tpu_custom_call.1} parent=1 // loop_exit
      _
    %1884 = vsyncpa [#allocation5], 1
    %s1885 = scalar_lea.sflag [#allocation5], 1
    %1886 = vsyncpa %s1885, 1
    %1887 = vsyncpa [#allocation8], 1
    %1888 = vsyncpa [#allocation6], 1
    %s1889 = scalar_lea.sflag [#allocation6], 1
    %1890 = vsyncpa %s1889, 1

</llo_original>
